<compile_context>
chip_gen: v7x
topology: tpu7x:2x2x1
jax: 0.10.0
libtpu: 0.0.40
codegen_flags: <defaults>
</compile_context>

<pallas_src>
import functools

import jax
import jax.numpy as jnp
from jax import lax
from jax.experimental import pallas as pl
from jax.experimental.pallas import tpu as pltpu

BN_EPS = 1e-5


def _round_up(x, m):
    return ((x + m - 1) // m) * m


def _default_vmem_limit():
    # Generation-aware VMEM budget: half of physical capacity, capped at 64 MiB
    # (v7x has 64 MiB/TC shared pipelining headroom vs 128 MiB on v5e/v6e).
    try:
        cap = int(getattr(pltpu.get_tpu_info(), "vmem_capacity_bytes"))
    except Exception:
        cap = 128 * 1024 * 1024
    return max(16 * 1024 * 1024, min(cap // 2, 64 * 1024 * 1024))


VMEM_LIMIT = _default_vmem_limit()


def _pick_tile(m, target, align=16):
    """Row tile that minimizes padding; >=2 tiles when possible (v7x megacore)."""
    nt = max(2 if m >= 2 * align else 1, pl.cdiv(m, target))
    tm = _round_up(pl.cdiv(m, nt), align)
    mp = _round_up(m, tm)
    return tm, mp, mp // tm


# ----------------------------------------------------------------------------
# Pallas kernel 1: tiled bf16 matmul (conv as im2col GEMM) + per-tile BN stats
# ----------------------------------------------------------------------------
def _matmul_stats_kernel(p_ref, w_ref, y_ref, s_ref, q_ref):
    # p: (TM, K) bf16  w: (K, Cout) bf16  y: (TM, Cout) bf16  s/q: (1,1,Cout) f32
    y = jnp.dot(p_ref[...], w_ref[...], preferred_element_type=jnp.float32)
    y_ref[...] = y.astype(y_ref.dtype)
    s_ref[...] = jnp.sum(y, axis=0, keepdims=True)[None]          # per-tile sum
    q_ref[...] = jnp.sum(y * y, axis=0, keepdims=True)[None]      # per-tile sumsq


# ----------------------------------------------------------------------------
# Pallas kernel 2: lane-dense BatchNorm-affine + ReLU (y*scale + shift, clamp 0)
# ----------------------------------------------------------------------------
def _scale_shift_relu_kernel(y_ref, a_ref, b_ref, o_ref):
    y = y_ref[...].astype(jnp.float32)
    o_ref[...] = jnp.maximum(y * a_ref[...] + b_ref[...], 0.0).astype(o_ref.dtype)


# ----------------------------------------------------------------------------
# Pallas kernel 3: tiled bf16 matmul + bias (hoisted LSTM input projection)
# ----------------------------------------------------------------------------
def _matmul_bias_kernel(x_ref, w_ref, b_ref, o_ref):
    y = jnp.dot(x_ref[...], w_ref[...], preferred_element_type=jnp.float32)
    o_ref[...] = (y + b_ref[...]).astype(o_ref.dtype)


# ----------------------------------------------------------------------------
# Pallas kernel 4: LSTM recurrence, single grid step, fori_loop over time
# ----------------------------------------------------------------------------
def _lstm_kernel(z_ref, whh_ref, h0_ref, c0_ref, y_ref, hN_ref, cN_ref):
    T = z_ref.shape[0]
    hp = h0_ref.shape[1]                     # padded hidden width (static)
    whh = whh_ref[...]                       # bf16, hoisted out of the loop

    def step(t, carry):
        h_prev, c_prev = carry
        # x-projection was precomputed (z_ref); one fused recurrent matmul.
        g = z_ref[t].astype(jnp.float32) + jnp.dot(
            h_prev.astype(whh.dtype), whh, preferred_element_type=jnp.float32)
        i_g = jax.nn.sigmoid(g[:, 0 * hp:1 * hp])
        f_g = jax.nn.sigmoid(g[:, 1 * hp:2 * hp])
        g_g = jnp.tanh(g[:, 2 * hp:3 * hp])
        o_g = jax.nn.sigmoid(g[:, 3 * hp:4 * hp])
        c_new = f_g * c_prev + i_g * g_g
        h_new = o_g * jnp.tanh(c_new)
        y_ref[t] = h_new
        return (h_new, c_new)

    h_fin, c_fin = lax.fori_loop(0, T, step, (h0_ref[...], c0_ref[...]))
    hN_ref[...] = h_fin
    cN_ref[...] = c_fin


# ----------------------------------------------------------------------------
# Wrappers
# ----------------------------------------------------------------------------
def im2col_nhwc(x, kh, kw, stride):
    """x: (N, H, W, C) -> (N*oh*ow, kh*kw*C), feature order (i, j, c)."""
    N, H, W, C = x.shape
    oh = (H - kh) // stride + 1
    ow = (W - kw) // stride + 1
    cols = []
    for i in range(kh):
        for j in range(kw):
            cols.append(x[:, i:i + oh * stride:stride,
                          j:j + ow * stride:stride, :])
    p = jnp.stack(cols, axis=3)                       # (N, oh, ow, kh*kw, C)
    p = p.reshape(N * oh * ow, kh * kw * C)
    return p, oh, ow


def conv_bn_relu_nhwc(x_nhwc, w_flat, gamma, beta, kh, kw, stride,
                      *, tm_target=1024):
    """conv (im2col GEMM) + BatchNorm2d(train) + ReLU, NHWC in / NHWC out (bf16)."""
    patches, oh, ow = im2col_nhwc(x_nhwc.astype(jnp.bfloat16), kh, kw, stride)
    M, K = patches.shape
    cout = w_flat.shape[1]

    tm, mp, nt = _pick_tile(M, tm_target)
    if mp != M:                            # zero pad rows: no effect on BN sums
        patches = jnp.pad(patches, ((0, mp - M), (0, 0)))

    y, psum, psq = pl.pallas_call(
        _matmul_stats_kernel,
        out_shape=(jax.ShapeDtypeStruct((mp, cout), jnp.bfloat16),
                   jax.ShapeDtypeStruct((nt, 1, cout), jnp.float32),
                   jax.ShapeDtypeStruct((nt, 1, cout), jnp.float32)),
        grid=(nt,),
        in_specs=[pl.BlockSpec((tm, K), lambda i: (i, 0)),
                  pl.BlockSpec((K, cout), lambda i: (0, 0))],
        out_specs=(pl.BlockSpec((tm, cout), lambda i: (i, 0)),
                   pl.BlockSpec((1, 1, cout), lambda i: (i, 0, 0)),
                   pl.BlockSpec((1, 1, cout), lambda i: (i, 0, 0))),
        compiler_params=pltpu.CompilerParams(
            dimension_semantics=("parallel",),
            vmem_limit_bytes=VMEM_LIMIT),
        cost_estimate=pl.CostEstimate(
            flops=2 * mp * K * cout, transcendentals=0,
            bytes_accessed=2 * (mp * K + K * cout + mp * cout) + 8 * nt * cout),
    )(patches, w_flat.astype(jnp.bfloat16))

    # BN training-mode stats over the true M rows (tiny reduction in plain JAX).
    s = jnp.sum(psum, axis=0).reshape(cout)
    q = jnp.sum(psq, axis=0).reshape(cout)
    mean = s / M
    var = jnp.maximum(q / M - mean * mean, 0.0)      # clamp: cancellation-safe
    scale = gamma * lax.rsqrt(var + BN_EPS)
    shift = beta - mean * scale

    # Lane-dense affine + ReLU: view (mp, cout) as (mp/rep, rep*cout) so stores
    # are full-128-lane vst; scale/shift are lane-tiled to match the view.
    rep = 128 // cout if (cout < 128 and 128 % cout == 0) else 1
    lw = rep * cout
    ma = mp // rep
    yl = y.reshape(ma, lw)
    scale_l = jnp.tile(scale, rep).reshape(1, lw).astype(jnp.float32)
    shift_l = jnp.tile(shift, rep).reshape(1, lw).astype(jnp.float32)

    ta, map_, nta = _pick_tile(ma, rep * tm_target)
    if map_ != ma:
        yl = jnp.pad(yl, ((0, map_ - ma), (0, 0)))

    out = pl.pallas_call(
        _scale_shift_relu_kernel,
        out_shape=jax.ShapeDtypeStruct((map_, lw), jnp.bfloat16),
        grid=(nta,),
        in_specs=[pl.BlockSpec((ta, lw), lambda i: (i, 0)),
                  pl.BlockSpec((1, lw), lambda i: (0, 0)),
                  pl.BlockSpec((1, lw), lambda i: (0, 0))],
        out_specs=pl.BlockSpec((ta, lw), lambda i: (i, 0)),
        compiler_params=pltpu.CompilerParams(
            dimension_semantics=("parallel",),
            vmem_limit_bytes=VMEM_LIMIT),
    )(yl, scale_l, shift_l)

    out = out[:ma].reshape(mp, cout)[:M]
    return out.reshape(x_nhwc.shape[0], oh, ow, cout)


def linear(x, w, b, *, tm_target=1024):
    """Tiled bf16 (M, K) @ (K, N) + b via Pallas; the hoisted X @ W_ih."""
    M, K = x.shape
    N = w.shape[1]
    tm, mp, nt = _pick_tile(M, tm_target)
    if mp != M:
        x = jnp.pad(x, ((0, mp - M), (0, 0)))
    y = pl.pallas_call(
        _matmul_bias_kernel,
        out_shape=jax.ShapeDtypeStruct((mp, N), jnp.bfloat16),
        grid=(nt,),
        in_specs=[pl.BlockSpec((tm, K), lambda i: (i, 0)),
                  pl.BlockSpec((K, N), lambda i: (0, 0)),
                  pl.BlockSpec((1, N), lambda i: (0, 0))],
        out_specs=pl.BlockSpec((tm, N), lambda i: (i, 0)),
        compiler_params=pltpu.CompilerParams(
            dimension_semantics=("parallel",),
            vmem_limit_bytes=VMEM_LIMIT),
        cost_estimate=pl.CostEstimate(
            flops=2 * mp * K * N, transcendentals=0,
            bytes_accessed=2 * (mp * K + K * N + mp * N) + 4 * N),
    )(x.astype(jnp.bfloat16), w.astype(jnp.bfloat16),
      b.reshape(1, N).astype(jnp.float32))
    return y[:M]


def lstm_forward(z_tbg, whh, h0, c0):
    """z_tbg: (T, Bp, 4*Hp) bf16 precomputed x@W_ih+b;  whh: (Hp, 4*Hp) bf16.

    Single pallas_call: everything VMEM-resident, recurrence via fori_loop.
    """
    T, Bp, G = z_tbg.shape
    Hp = whh.shape[0]
    # TODO(synk): chunk over T with a grid + BlockSpec if T*Bp*G outgrows VMEM.
    return pl.pallas_call(
        _lstm_kernel,
        out_shape=(jax.ShapeDtypeStruct((T, Bp, Hp), jnp.float32),
                   jax.ShapeDtypeStruct((Bp, Hp), jnp.float32),
                   jax.ShapeDtypeStruct((Bp, Hp), jnp.float32)),
        compiler_params=pltpu.CompilerParams(vmem_limit_bytes=VMEM_LIMIT),
    )(z_tbg, whh, h0, c0)


# ----------------------------------------------------------------------------
# Parameter setup & forward orchestration
# ----------------------------------------------------------------------------
def conv_size_out(size, k, s):
    return (size - (k - 1) - 1) // s + 1


def init_drqn_params(key, h, w, c, outputs):
    ks = jax.random.split(key, 9)
    convw = conv_size_out(conv_size_out(w, 8, 4), 4, 2)
    convh = conv_size_out(conv_size_out(h, 8, 4), 4, 2)
    d_in = convw * convh * 64
    hp = _round_up(outputs, 32)            # padded hidden; 4*hp multiple of 128
    g = 4 * hp

    def pt_conv_to_nhwc(wt):               # (cout, cin, kh, kw) -> (kh*kw*cin, cout)
        return wt.transpose(2, 3, 1, 0).reshape(-1, wt.shape[0])

    p = {}
    # Conv biases omitted: BatchNorm(train) mean-subtraction cancels them exactly.
    p["w1"] = pt_conv_to_nhwc(0.05 * jax.random.normal(ks[0], (32, c, 8, 8)))
    p["g1"] = 1.0 + 0.05 * jax.random.normal(ks[1], (32,))
    p["be1"] = 0.05 * jax.random.normal(ks[2], (32,))
    p["w2"] = pt_conv_to_nhwc(0.05 * jax.random.normal(ks[3], (64, 32, 4, 4)))
    p["g2"] = 1.0 + 0.05 * jax.random.normal(ks[4], (64,))
    p["be2"] = 0.05 * jax.random.normal(ks[5], (64,))

    # LSTM head, gate order (i, f, g, o), packed into lane-padded fused weights.
    # NOTE: feature rows follow the NHWC flatten order (h, w, c); loading real
    # PyTorch weights would require permuting W_ih rows from (c, h, w) order.
    wih = 0.1 * jax.random.normal(ks[6], (4, d_in, outputs))
    whh = 0.1 * jax.random.normal(ks[7], (4, outputs, outputs))
    b = 0.1 * jax.random.normal(ks[8], (4, outputs))        # b_ih + b_hh combined

    wih_p = jnp.zeros((d_in, g), jnp.float32)
    whh_p = jnp.zeros((hp, g), jnp.float32)
    b_p = jnp.zeros((g,), jnp.float32)
    for k in range(4):
        wih_p = wih_p.at[:, k * hp:k * hp + outputs].set(wih[k])
        whh_p = whh_p.at[:outputs, k * hp:k * hp + outputs].set(whh[k])
        b_p = b_p.at[k * hp:k * hp + outputs].set(b[k])
    p["wih"] = wih_p
    p["whh"] = whh_p
    p["b_lstm"] = b_p

    # GEMM operands live in bf16 (MXU native); BN affine + biases stay f32.
    bf16_keys = ("w1", "w2", "wih", "whh")
    return {k: v.astype(jnp.bfloat16 if k in bf16_keys else jnp.float32)
            for k, v in p.items()}


@functools.partial(jax.jit, static_argnames=("outputs",))
def drqn_forward(x, params, h0, c0, *, outputs):
    # x: (B, T, C, H, W) or (B, C, H, W) float32 (NCHW per frame, like PyTorch)
    if x.ndim == 4:
        x = x[:, None]
    B, T, C, H, W = x.shape
    xf = x.reshape(B * T, C, H, W).transpose(0, 2, 3, 1)     # one entry NHWC transpose

    # conv1 -> bn1 -> relu ; conv2 -> bn2 -> relu  (NHWC, bf16 activations)
    y1 = conv_bn_relu_nhwc(xf, params["w1"], params["g1"], params["be1"], 8, 8, 4)
    y2 = conv_bn_relu_nhwc(y1, params["w2"], params["g2"], params["be2"], 4, 4, 2)

    BT, oh2, ow2, c2 = y2.shape
    feat = y2.reshape(BT, oh2 * ow2 * c2)        # (h, w, c) order, matches W_ih rows

    # Hoisted LSTM input projection for every timestep at once.
    z = linear(feat, params["wih"], params["b_lstm"])        # (B*T, 4*Hp) bf16

    Hp = params["whh"].shape[0]
    G = 4 * Hp
    z = z.reshape(B, T, G).transpose(1, 0, 2)                # (T, B, 4*Hp)
    Bp = _round_up(B, 8)
    if Bp != B:
        z = jnp.pad(z, ((0, 0), (0, Bp - B), (0, 0)))
    h0p = jnp.zeros((Bp, Hp), jnp.float32).at[:B, :outputs].set(h0)
    c0p = jnp.zeros((Bp, Hp), jnp.float32).at[:B, :outputs].set(c0)

    y, hN, cN = lstm_forward(z, params["whh"], h0p, c0p)

    y = y[:, :B, :outputs].transpose(1, 0, 2)                # (B, T, outputs)
    out = jnp.squeeze(y)                                     # torch.squeeze(output)
    hidden = (hN[:B, :outputs][None], cN[:B, :outputs][None])
    return out, hidden


if __name__ == "__main__":
    # Small but consistent shapes: h=w=28, c=4 => conv feature size 2*2*64 = 256
    B, T, C, H, W = 2, 3, 4, 28, 28
    OUTPUTS = 8

    key = jax.random.PRNGKey(0)
    k_x, k_p = jax.random.split(key)
    x = jax.random.normal(k_x, (B, T, C, H, W), dtype=jnp.float32)
    params = init_drqn_params(k_p, H, W, C, OUTPUTS)

    # hidden_in=None in the PyTorch module -> zero initial (h, c)
    h0 = jnp.zeros((B, OUTPUTS), jnp.float32)
    c0 = jnp.zeros((B, OUTPUTS), jnp.float32)

    out, (h_n, c_n) = drqn_forward(x, params, h0, c0, outputs=OUTPUTS)
    jax.block_until_ready((out, h_n, c_n))

    assert out.shape == (B, T, OUTPUTS)
    assert h_n.shape == (1, B, OUTPUTS) and c_n.shape == (1, B, OUTPUTS)
    assert bool(jnp.all(jnp.isfinite(out)))
    print("KERNEL_OK")
</pallas_src>

<mosaic_0001>
module attributes {stable_mosaic.version = 11 : i64} {
  func.func @_matmul_stats_kernel(%arg0: i32, %arg1: memref<112x256xbf16, #tpu.memory_space<vmem>>, %arg2: memref<256x32xbf16, #tpu.memory_space<vmem>>, %arg3: memref<112x32xbf16, #tpu.memory_space<vmem>>, %arg4: memref<1x1x32xf32, #tpu.memory_space<vmem>>, %arg5: memref<1x1x32xf32, #tpu.memory_space<vmem>>) attributes {dimension_semantics = [#tpu.dimension_semantics<parallel>], iteration_bounds = array<i64: 2>, scalar_prefetch = 0 : i64, scratch_operands = 0 : i64, tpu.core_type = #tpu.core_type<tc>, window_params = [{transform_indices = @transform_0, window_bounds = array<i64: 112, 256>}, {pipeline_mode = #tpu.pipeline_mode<synchronous>, transform_indices = @transform_1, window_bounds = array<i64: 256, 32>}, {transform_indices = @transform_2, window_bounds = array<i64: 112, 32>}, {transform_indices = @transform_3, window_bounds = array<i64: 1, 1, 32>}, {transform_indices = @transform_4, window_bounds = array<i64: 1, 1, 32>}]} {
    %c0 = arith.constant 0 : index
    %c0_0 = arith.constant 0 : index
    %0 = vector.load %arg1[%c0, %c0_0] : memref<112x256xbf16, #tpu.memory_space<vmem>>, vector<112x256xbf16>
    %c0_1 = arith.constant 0 : index
    %c0_2 = arith.constant 0 : index
    %1 = vector.load %arg2[%c0_1, %c0_2] : memref<256x32xbf16, #tpu.memory_space<vmem>>, vector<256x32xbf16>
    %cst = arith.constant dense<0.000000e+00> : vector<112x32xf32>
    %2 = tpu.matmul %0, %1, %cst {dimension_numbers = #tpu.dot_dimension_numbers<[1], [0], [0], [1], [0, 0, 1, 1], [], []>} : vector<112x256xbf16>, vector<256x32xbf16>, vector<112x32xf32> -> vector<112x32xf32>
    %3 = arith.truncf %2 : vector<112x32xf32> to vector<112x32xbf16>
    %c0_3 = arith.constant 0 : index
    %c0_4 = arith.constant 0 : index
    %4 = vector.load %arg3[%c0_3, %c0_4] : memref<112x32xbf16, #tpu.memory_space<vmem>>, vector<112x32xbf16>
    tpu.vector_store %arg3[%c0_3, %c0_4], %3 {strides = array<i32>} : memref<112x32xbf16, #tpu.memory_space<vmem>>, vector<112x32xbf16>,
    %cst_5 = arith.constant dense<0.000000e+00> : vector<32xf32>
    %5 = vector.multi_reduction <add>, %2, %cst_5 [0] : vector<112x32xf32> to vector<32xf32>
    %6 = vector.shape_cast %5 : vector<32xf32> to vector<1x32xf32>
    %7 = vector.shape_cast %6 : vector<1x32xf32> to vector<1x1x32xf32>
    %c0_6 = arith.constant 0 : index
    %c0_7 = arith.constant 0 : index
    %c0_8 = arith.constant 0 : index
    %8 = vector.load %arg4[%c0_6, %c0_7, %c0_8] : memref<1x1x32xf32, #tpu.memory_space<vmem>>, vector<1x1x32xf32>
    tpu.vector_store %arg4[%c0_6, %c0_7, %c0_8], %7 {strides = array<i32>} : memref<1x1x32xf32, #tpu.memory_space<vmem>>, vector<1x1x32xf32>,
    %9 = arith.mulf %2, %2 : vector<112x32xf32>
    %cst_9 = arith.constant dense<0.000000e+00> : vector<32xf32>
    %10 = vector.multi_reduction <add>, %9, %cst_9 [0] : vector<112x32xf32> to vector<32xf32>
    %11 = vector.shape_cast %10 : vector<32xf32> to vector<1x32xf32>
    %12 = vector.shape_cast %11 : vector<1x32xf32> to vector<1x1x32xf32>
    %c0_10 = arith.constant 0 : index
    %c0_11 = arith.constant 0 : index
    %c0_12 = arith.constant 0 : index
    %13 = vector.load %arg5[%c0_10, %c0_11, %c0_12] : memref<1x1x32xf32, #tpu.memory_space<vmem>>, vector<1x1x32xf32>
    tpu.vector_store %arg5[%c0_10, %c0_11, %c0_12], %12 {strides = array<i32>} : memref<1x1x32xf32, #tpu.memory_space<vmem>>, vector<1x1x32xf32>,
    return
  }
  func.func @transform_0(%arg0: i32) -> (i32, i32) {
    %c0_i32 = arith.constant 0 : i32
    %c0_i32_0 = arith.constant 0 : i32
    return %arg0, %c0_i32 : i32, i32
  }
  func.func @transform_1(%arg0: i32) -> (i32, i32) {
    %c0_i32 = arith.constant 0 : i32
    %c0_i32_0 = arith.constant 0 : i32
    %c0_i32_1 = arith.constant 0 : i32
    return %c0_i32, %c0_i32_0 : i32, i32
  }
  func.func @transform_2(%arg0: i32) -> (i32, i32) {
    %c0_i32 = arith.constant 0 : i32
    %c0_i32_0 = arith.constant 0 : i32
    return %arg0, %c0_i32 : i32, i32
  }
  func.func @transform_3(%arg0: i32) -> (i32, i32, i32) {
    %c0_i32 = arith.constant 0 : i32
    %c0_i32_0 = arith.constant 0 : i32
    %c0_i32_1 = arith.constant 0 : i32
    return %arg0, %c0_i32, %c0_i32_0 : i32, i32, i32
  }
  func.func @transform_4(%arg0: i32) -> (i32, i32, i32) {
    %c0_i32 = arith.constant 0 : i32
    %c0_i32_0 = arith.constant 0 : i32
    %c0_i32_1 = arith.constant 0 : i32
    return %arg0, %c0_i32, %c0_i32_0 : i32, i32, i32
  }
}

module attributes {stable_mosaic.version = 11 : i64} {
  func.func @_scale_shift_relu_kernel(%arg0: i32, %arg1: memref<32x128xbf16, #tpu.memory_space<vmem>>, %arg2: memref<1x128xf32, #tpu.memory_space<vmem>>, %arg3: memref<1x128xf32, #tpu.memory_space<vmem>>, %arg4: memref<32x128xbf16, #tpu.memory_space<vmem>>) attributes {dimension_semantics = [#tpu.dimension_semantics<parallel>], iteration_bounds = array<i64: 2>, scalar_prefetch = 0 : i64, scratch_operands = 0 : i64, tpu.core_type = #tpu.core_type<tc>, window_params = [{transform_indices = @transform_0, window_bounds = array<i64: 32, 128>}, {pipeline_mode = #tpu.pipeline_mode<synchronous>, transform_indices = @transform_1, window_bounds = array<i64: 1, 128>}, {pipeline_mode = #tpu.pipeline_mode<synchronous>, transform_indices = @transform_2, window_bounds = array<i64: 1, 128>}, {transform_indices = @transform_3, window_bounds = array<i64: 32, 128>}]} {
    %c0 = arith.constant 0 : index
    %c0_0 = arith.constant 0 : index
    %0 = vector.load %arg1[%c0, %c0_0] : memref<32x128xbf16, #tpu.memory_space<vmem>>, vector<32x128xbf16>
    %1 = arith.extf %0 : vector<32x128xbf16> to vector<32x128xf32>
    %c0_1 = arith.constant 0 : index
    %c0_2 = arith.constant 0 : index
    %2 = vector.load %arg2[%c0_1, %c0_2] : memref<1x128xf32, #tpu.memory_space<vmem>>, vector<1x128xf32>
    %3 = vector.broadcast %2 : vector<1x128xf32> to vector<32x128xf32>
    %4 = arith.mulf %1, %3 : vector<32x128xf32>
    %c0_3 = arith.constant 0 : index
    %c0_4 = arith.constant 0 : index
    %5 = vector.load %arg3[%c0_3, %c0_4] : memref<1x128xf32, #tpu.memory_space<vmem>>, vector<1x128xf32>
    %6 = vector.broadcast %5 : vector<1x128xf32> to vector<32x128xf32>
    %7 = arith.addf %4, %6 : vector<32x128xf32>
    %cst = arith.constant 0.000000e+00 : f32
    %8 = vector.broadcast %cst : f32 to vector<32x128xf32>
    %9 = arith.maximumf %7, %8 : vector<32x128xf32>
    %10 = arith.truncf %9 : vector<32x128xf32> to vector<32x128xbf16>
    %c0_5 = arith.constant 0 : index
    %c0_6 = arith.constant 0 : index
    %11 = vector.load %arg4[%c0_5, %c0_6] : memref<32x128xbf16, #tpu.memory_space<vmem>>, vector<32x128xbf16>
    tpu.vector_store %arg4[%c0_5, %c0_6], %10 {strides = array<i32>} : memref<32x128xbf16, #tpu.memory_space<vmem>>, vector<32x128xbf16>,
    return
  }
  func.func @transform_0(%arg0: i32) -> (i32, i32) {
    %c0_i32 = arith.constant 0 : i32
    %c0_i32_0 = arith.constant 0 : i32
    return %arg0, %c0_i32 : i32, i32
  }
  func.func @transform_1(%arg0: i32) -> (i32, i32) {
    %c0_i32 = arith.constant 0 : i32
    %c0_i32_0 = arith.constant 0 : i32
    %c0_i32_1 = arith.constant 0 : i32
    return %c0_i32, %c0_i32_0 : i32, i32
  }
  func.func @transform_2(%arg0: i32) -> (i32, i32) {
    %c0_i32 = arith.constant 0 : i32
    %c0_i32_0 = arith.constant 0 : i32
    %c0_i32_1 = arith.constant 0 : i32
    return %c0_i32, %c0_i32_0 : i32, i32
  }
  func.func @transform_3(%arg0: i32) -> (i32, i32) {
    %c0_i32 = arith.constant 0 : i32
    %c0_i32_0 = arith.constant 0 : i32
    return %arg0, %c0_i32 : i32, i32
  }
}

module attributes {stable_mosaic.version = 11 : i64} {
  func.func @_matmul_stats_kernel(%arg0: i32, %arg1: memref<32x512xbf16, #tpu.memory_space<vmem>>, %arg2: memref<512x64xbf16, #tpu.memory_space<vmem>>, %arg3: memref<32x64xbf16, #tpu.memory_space<vmem>>, %arg4: memref<1x1x64xf32, #tpu.memory_space<vmem>>, %arg5: memref<1x1x64xf32, #tpu.memory_space<vmem>>) attributes {dimension_semantics = [#tpu.dimension_semantics<parallel>], iteration_bounds = array<i64: 1>, scalar_prefetch = 0 : i64, scratch_operands = 0 : i64, tpu.core_type = #tpu.core_type<tc>, window_params = [{transform_indices = @transform_0, window_bounds = array<i64: 32, 512>}, {pipeline_mode = #tpu.pipeline_mode<synchronous>, transform_indices = @transform_1, window_bounds = array<i64: 512, 64>}, {transform_indices = @transform_2, window_bounds = array<i64: 32, 64>}, {transform_indices = @transform_3, window_bounds = array<i64: 1, 1, 64>}, {transform_indices = @transform_4, window_bounds = array<i64: 1, 1, 64>}]} {
    %c0 = arith.constant 0 : index
    %c0_0 = arith.constant 0 : index
    %0 = vector.load %arg1[%c0, %c0_0] : memref<32x512xbf16, #tpu.memory_space<vmem>>, vector<32x512xbf16>
    %c0_1 = arith.constant 0 : index
    %c0_2 = arith.constant 0 : index
    %1 = vector.load %arg2[%c0_1, %c0_2] : memref<512x64xbf16, #tpu.memory_space<vmem>>, vector<512x64xbf16>
    %cst = arith.constant dense<0.000000e+00> : vector<32x64xf32>
    %2 = tpu.matmul %0, %1, %cst {dimension_numbers = #tpu.dot_dimension_numbers<[1], [0], [0], [1], [0, 0, 1, 1], [], []>} : vector<32x512xbf16>, vector<512x64xbf16>, vector<32x64xf32> -> vector<32x64xf32>
    %3 = arith.truncf %2 : vector<32x64xf32> to vector<32x64xbf16>
    %c0_3 = arith.constant 0 : index
    %c0_4 = arith.constant 0 : index
    %4 = vector.load %arg3[%c0_3, %c0_4] : memref<32x64xbf16, #tpu.memory_space<vmem>>, vector<32x64xbf16>
    tpu.vector_store %arg3[%c0_3, %c0_4], %3 {strides = array<i32>} : memref<32x64xbf16, #tpu.memory_space<vmem>>, vector<32x64xbf16>,
    %cst_5 = arith.constant dense<0.000000e+00> : vector<64xf32>
    %5 = vector.multi_reduction <add>, %2, %cst_5 [0] : vector<32x64xf32> to vector<64xf32>
    %6 = vector.shape_cast %5 : vector<64xf32> to vector<1x64xf32>
    %7 = vector.shape_cast %6 : vector<1x64xf32> to vector<1x1x64xf32>
    %c0_6 = arith.constant 0 : index
    %c0_7 = arith.constant 0 : index
    %c0_8 = arith.constant 0 : index
    %8 = vector.load %arg4[%c0_6, %c0_7, %c0_8] : memref<1x1x64xf32, #tpu.memory_space<vmem>>, vector<1x1x64xf32>
    tpu.vector_store %arg4[%c0_6, %c0_7, %c0_8], %7 {strides = array<i32>} : memref<1x1x64xf32, #tpu.memory_space<vmem>>, vector<1x1x64xf32>,
    %9 = arith.mulf %2, %2 : vector<32x64xf32>
    %cst_9 = arith.constant dense<0.000000e+00> : vector<64xf32>
    %10 = vector.multi_reduction <add>, %9, %cst_9 [0] : vector<32x64xf32> to vector<64xf32>
    %11 = vector.shape_cast %10 : vector<64xf32> to vector<1x64xf32>
    %12 = vector.shape_cast %11 : vector<1x64xf32> to vector<1x1x64xf32>
    %c0_10 = arith.constant 0 : index
    %c0_11 = arith.constant 0 : index
    %c0_12 = arith.constant 0 : index
    %13 = vector.load %arg5[%c0_10, %c0_11, %c0_12] : memref<1x1x64xf32, #tpu.memory_space<vmem>>, vector<1x1x64xf32>
    tpu.vector_store %arg5[%c0_10, %c0_11, %c0_12], %12 {strides = array<i32>} : memref<1x1x64xf32, #tpu.memory_space<vmem>>, vector<1x1x64xf32>,
    return
  }
  func.func @transform_0(%arg0: i32) -> (i32, i32) {
    %c0_i32 = arith.constant 0 : i32
    %c0_i32_0 = arith.constant 0 : i32
    return %arg0, %c0_i32 : i32, i32
  }
  func.func @transform_1(%arg0: i32) -> (i32, i32) {
    %c0_i32 = arith.constant 0 : i32
    %c0_i32_0 = arith.constant 0 : i32
    %c0_i32_1 = arith.constant 0 : i32
    return %c0_i32, %c0_i32_0 : i32, i32
  }
  func.func @transform_2(%arg0: i32) -> (i32, i32) {
    %c0_i32 = arith.constant 0 : i32
    %c0_i32_0 = arith.constant 0 : i32
    return %arg0, %c0_i32 : i32, i32
  }
  func.func @transform_3(%arg0: i32) -> (i32, i32, i32) {
    %c0_i32 = arith.constant 0 : i32
    %c0_i32_0 = arith.constant 0 : i32
    %c0_i32_1 = arith.constant 0 : i32
    return %arg0, %c0_i32, %c0_i32_0 : i32, i32, i32
  }
  func.func @transform_4(%arg0: i32) -> (i32, i32, i32) {
    %c0_i32 = arith.constant 0 : i32
    %c0_i32_0 = arith.constant 0 : i32
    %c0_i32_1 = arith.constant 0 : i32
    return %arg0, %c0_i32, %c0_i32_0 : i32, i32, i32
  }
}

module attributes {stable_mosaic.version = 11 : i64} {
  func.func @_scale_shift_relu_kernel(%arg0: i32, %arg1: memref<16x128xbf16, #tpu.memory_space<vmem>>, %arg2: memref<1x128xf32, #tpu.memory_space<vmem>>, %arg3: memref<1x128xf32, #tpu.memory_space<vmem>>, %arg4: memref<16x128xbf16, #tpu.memory_space<vmem>>) attributes {dimension_semantics = [#tpu.dimension_semantics<parallel>], iteration_bounds = array<i64: 1>, scalar_prefetch = 0 : i64, scratch_operands = 0 : i64, tpu.core_type = #tpu.core_type<tc>, window_params = [{transform_indices = @transform_0, window_bounds = array<i64: 16, 128>}, {pipeline_mode = #tpu.pipeline_mode<synchronous>, transform_indices = @transform_1, window_bounds = array<i64: 1, 128>}, {pipeline_mode = #tpu.pipeline_mode<synchronous>, transform_indices = @transform_2, window_bounds = array<i64: 1, 128>}, {transform_indices = @transform_3, window_bounds = array<i64: 16, 128>}]} {
    %c0 = arith.constant 0 : index
    %c0_0 = arith.constant 0 : index
    %0 = vector.load %arg1[%c0, %c0_0] : memref<16x128xbf16, #tpu.memory_space<vmem>>, vector<16x128xbf16>
    %1 = arith.extf %0 : vector<16x128xbf16> to vector<16x128xf32>
    %c0_1 = arith.constant 0 : index
    %c0_2 = arith.constant 0 : index
    %2 = vector.load %arg2[%c0_1, %c0_2] : memref<1x128xf32, #tpu.memory_space<vmem>>, vector<1x128xf32>
    %3 = vector.broadcast %2 : vector<1x128xf32> to vector<16x128xf32>
    %4 = arith.mulf %1, %3 : vector<16x128xf32>
    %c0_3 = arith.constant 0 : index
    %c0_4 = arith.constant 0 : index
    %5 = vector.load %arg3[%c0_3, %c0_4] : memref<1x128xf32, #tpu.memory_space<vmem>>, vector<1x128xf32>
    %6 = vector.broadcast %5 : vector<1x128xf32> to vector<16x128xf32>
    %7 = arith.addf %4, %6 : vector<16x128xf32>
    %cst = arith.constant 0.000000e+00 : f32
    %8 = vector.broadcast %cst : f32 to vector<16x128xf32>
    %9 = arith.maximumf %7, %8 : vector<16x128xf32>
    %10 = arith.truncf %9 : vector<16x128xf32> to vector<16x128xbf16>
    %c0_5 = arith.constant 0 : index
    %c0_6 = arith.constant 0 : index
    %11 = vector.load %arg4[%c0_5, %c0_6] : memref<16x128xbf16, #tpu.memory_space<vmem>>, vector<16x128xbf16>
    tpu.vector_store %arg4[%c0_5, %c0_6], %10 {strides = array<i32>} : memref<16x128xbf16, #tpu.memory_space<vmem>>, vector<16x128xbf16>,
    return
  }
  func.func @transform_0(%arg0: i32) -> (i32, i32) {
    %c0_i32 = arith.constant 0 : i32
    %c0_i32_0 = arith.constant 0 : i32
    return %arg0, %c0_i32 : i32, i32
  }
  func.func @transform_1(%arg0: i32) -> (i32, i32) {
    %c0_i32 = arith.constant 0 : i32
    %c0_i32_0 = arith.constant 0 : i32
    %c0_i32_1 = arith.constant 0 : i32
    return %c0_i32, %c0_i32_0 : i32, i32
  }
  func.func @transform_2(%arg0: i32) -> (i32, i32) {
    %c0_i32 = arith.constant 0 : i32
    %c0_i32_0 = arith.constant 0 : i32
    %c0_i32_1 = arith.constant 0 : i32
    return %c0_i32, %c0_i32_0 : i32, i32
  }
  func.func @transform_3(%arg0: i32) -> (i32, i32) {
    %c0_i32 = arith.constant 0 : i32
    %c0_i32_0 = arith.constant 0 : i32
    return %arg0, %c0_i32 : i32, i32
  }
}

module attributes {stable_mosaic.version = 11 : i64} {
  func.func @_matmul_bias_kernel(%arg0: i32, %arg1: memref<16x256xbf16, #tpu.memory_space<vmem>>, %arg2: memref<256x128xbf16, #tpu.memory_space<vmem>>, %arg3: memref<1x128xf32, #tpu.memory_space<vmem>>, %arg4: memref<16x128xbf16, #tpu.memory_space<vmem>>) attributes {dimension_semantics = [#tpu.dimension_semantics<parallel>], iteration_bounds = array<i64: 1>, scalar_prefetch = 0 : i64, scratch_operands = 0 : i64, tpu.core_type = #tpu.core_type<tc>, window_params = [{transform_indices = @transform_0, window_bounds = array<i64: 16, 256>}, {pipeline_mode = #tpu.pipeline_mode<synchronous>, transform_indices = @transform_1, window_bounds = array<i64: 256, 128>}, {pipeline_mode = #tpu.pipeline_mode<synchronous>, transform_indices = @transform_2, window_bounds = array<i64: 1, 128>}, {transform_indices = @transform_3, window_bounds = array<i64: 16, 128>}]} {
    %c0 = arith.constant 0 : index
    %c0_0 = arith.constant 0 : index
    %0 = vector.load %arg1[%c0, %c0_0] : memref<16x256xbf16, #tpu.memory_space<vmem>>, vector<16x256xbf16>
    %c0_1 = arith.constant 0 : index
    %c0_2 = arith.constant 0 : index
    %1 = vector.load %arg2[%c0_1, %c0_2] : memref<256x128xbf16, #tpu.memory_space<vmem>>, vector<256x128xbf16>
    %cst = arith.constant dense<0.000000e+00> : vector<16x128xf32>
    %2 = tpu.matmul %0, %1, %cst {dimension_numbers = #tpu.dot_dimension_numbers<[1], [0], [0], [1], [0, 0, 1, 1], [], []>} : vector<16x256xbf16>, vector<256x128xbf16>, vector<16x128xf32> -> vector<16x128xf32>
    %c0_3 = arith.constant 0 : index
    %c0_4 = arith.constant 0 : index
    %3 = vector.load %arg3[%c0_3, %c0_4] : memref<1x128xf32, #tpu.memory_space<vmem>>, vector<1x128xf32>
    %4 = vector.broadcast %3 : vector<1x128xf32> to vector<16x128xf32>
    %5 = arith.addf %2, %4 : vector<16x128xf32>
    %6 = arith.truncf %5 : vector<16x128xf32> to vector<16x128xbf16>
    %c0_5 = arith.constant 0 : index
    %c0_6 = arith.constant 0 : index
    %7 = vector.load %arg4[%c0_5, %c0_6] : memref<16x128xbf16, #tpu.memory_space<vmem>>, vector<16x128xbf16>
    tpu.vector_store %arg4[%c0_5, %c0_6], %6 {strides = array<i32>} : memref<16x128xbf16, #tpu.memory_space<vmem>>, vector<16x128xbf16>,
    return
  }
  func.func @transform_0(%arg0: i32) -> (i32, i32) {
    %c0_i32 = arith.constant 0 : i32
    %c0_i32_0 = arith.constant 0 : i32
    return %arg0, %c0_i32 : i32, i32
  }
  func.func @transform_1(%arg0: i32) -> (i32, i32) {
    %c0_i32 = arith.constant 0 : i32
    %c0_i32_0 = arith.constant 0 : i32
    %c0_i32_1 = arith.constant 0 : i32
    return %c0_i32, %c0_i32_0 : i32, i32
  }
  func.func @transform_2(%arg0: i32) -> (i32, i32) {
    %c0_i32 = arith.constant 0 : i32
    %c0_i32_0 = arith.constant 0 : i32
    %c0_i32_1 = arith.constant 0 : i32
    return %c0_i32, %c0_i32_0 : i32, i32
  }
  func.func @transform_3(%arg0: i32) -> (i32, i32) {
    %c0_i32 = arith.constant 0 : i32
    %c0_i32_0 = arith.constant 0 : i32
    return %arg0, %c0_i32 : i32, i32
  }
}

module attributes {stable_mosaic.version = 11 : i64} {
  func.func @_lstm_kernel(%arg0: memref<3x8x128xbf16, #tpu.memory_space<vmem>>, %arg1: memref<32x128xbf16, #tpu.memory_space<vmem>>, %arg2: memref<8x32xf32, #tpu.memory_space<vmem>>, %arg3: memref<8x32xf32, #tpu.memory_space<vmem>>, %arg4: memref<3x8x32xf32, #tpu.memory_space<vmem>>, %arg5: memref<8x32xf32, #tpu.memory_space<vmem>>, %arg6: memref<8x32xf32, #tpu.memory_space<vmem>>) attributes {dimension_semantics = [], scalar_prefetch = 0 : i64, scratch_operands = 0 : i64, tpu.core_type = #tpu.core_type<tc>} {
    %c0 = arith.constant 0 : index
    %c0_0 = arith.constant 0 : index
    %0 = vector.load %arg1[%c0, %c0_0] : memref<32x128xbf16, #tpu.memory_space<vmem>>, vector<32x128xbf16>
    %c0_1 = arith.constant 0 : index
    %c0_2 = arith.constant 0 : index
    %1 = vector.load %arg2[%c0_1, %c0_2] : memref<8x32xf32, #tpu.memory_space<vmem>>, vector<8x32xf32>
    %c0_3 = arith.constant 0 : index
    %c0_4 = arith.constant 0 : index
    %2 = vector.load %arg3[%c0_3, %c0_4] : memref<8x32xf32, #tpu.memory_space<vmem>>, vector<8x32xf32>
    %c0_i32 = arith.constant 0 : i32
    %c3_i32 = arith.constant 3 : i32
    %3 = arith.addi %c0_i32, %c3_i32 : i32
    %c1_i32 = arith.constant 1 : i32
    %4:2 = scf.for %arg7 = %c0_i32 to %3 step %c1_i32 iter_args(%arg8 = %1, %arg9 = %2) -> (vector<8x32xf32>, vector<8x32xf32>)  : i32 {
      %7 = arith.index_cast %arg7 : i32 to index
      %c0_10 = arith.constant 0 : index
      %c0_11 = arith.constant 0 : index
      %8 = vector.load %arg0[%7, %c0_10, %c0_11] : memref<3x8x128xbf16, #tpu.memory_space<vmem>>, vector<1x8x128xbf16>
      %9 = vector.shape_cast %8 : vector<1x8x128xbf16> to vector<8x128xbf16>
      %10 = arith.extf %9 : vector<8x128xbf16> to vector<8x128xf32>
      %11 = arith.truncf %arg8 : vector<8x32xf32> to vector<8x32xbf16>
      %cst = arith.constant dense<0.000000e+00> : vector<8x128xf32>
      %12 = tpu.matmul %11, %0, %cst {dimension_numbers = #tpu.dot_dimension_numbers<[1], [0], [0], [1], [0, 0, 1, 1], [], []>} : vector<8x32xbf16>, vector<32x128xbf16>, vector<8x128xf32> -> vector<8x128xf32>
      %13 = arith.addf %10, %12 : vector<8x128xf32>
      %14 = vector.extract_strided_slice %13 {offsets = [0, 0], sizes = [8, 32], strides = [1, 1]} : vector<8x128xf32> to vector<8x32xf32>
      %15 = arith.negf %14 : vector<8x32xf32>
      %16 = math.exp %15 : vector<8x32xf32>
      %cst_12 = arith.constant 1.000000e+00 : f32
      %17 = vector.broadcast %cst_12 : f32 to vector<8x32xf32>
      %18 = arith.addf %17, %16 : vector<8x32xf32>
      %19 = arith.divf %17, %18 : vector<8x32xf32>
      %20 = vector.extract_strided_slice %13 {offsets = [0, 32], sizes = [8, 32], strides = [1, 1]} : vector<8x128xf32> to vector<8x32xf32>
      %21 = arith.negf %20 : vector<8x32xf32>
      %22 = math.exp %21 : vector<8x32xf32>
      %cst_13 = arith.constant 1.000000e+00 : f32
      %23 = vector.broadcast %cst_13 : f32 to vector<8x32xf32>
      %24 = arith.addf %23, %22 : vector<8x32xf32>
      %25 = arith.divf %23, %24 : vector<8x32xf32>
      %26 = vector.extract_strided_slice %13 {offsets = [0, 64], sizes = [8, 32], strides = [1, 1]} : vector<8x128xf32> to vector<8x32xf32>
      %27 = math.tanh %26 : vector<8x32xf32>
      %28 = vector.extract_strided_slice %13 {offsets = [0, 96], sizes = [8, 32], strides = [1, 1]} : vector<8x128xf32> to vector<8x32xf32>
      %29 = arith.negf %28 : vector<8x32xf32>
      %30 = math.exp %29 : vector<8x32xf32>
      %cst_14 = arith.constant 1.000000e+00 : f32
      %31 = vector.broadcast %cst_14 : f32 to vector<8x32xf32>
      %32 = arith.addf %31, %30 : vector<8x32xf32>
      %33 = arith.divf %31, %32 : vector<8x32xf32>
      %34 = arith.mulf %25, %arg9 : vector<8x32xf32>
      %35 = arith.mulf %19, %27 : vector<8x32xf32>
      %36 = arith.addf %34, %35 : vector<8x32xf32>
      %37 = math.tanh %36 : vector<8x32xf32>
      %38 = arith.mulf %33, %37 : vector<8x32xf32>
      %39 = arith.index_cast %arg7 : i32 to index
      %c0_15 = arith.constant 0 : index
      %c0_16 = arith.constant 0 : index
      %40 = vector.load %arg4[%39, %c0_15, %c0_16] : memref<3x8x32xf32, #tpu.memory_space<vmem>>, vector<1x8x32xf32>
      %41 = vector.shape_cast %40 : vector<1x8x32xf32> to vector<8x32xf32>
      %42 = vector.shape_cast %38 : vector<8x32xf32> to vector<1x8x32xf32>
      tpu.vector_store %arg4[%39, %c0_15, %c0_16], %42 {strides = array<i32>} : memref<3x8x32xf32, #tpu.memory_space<vmem>>, vector<1x8x32xf32>,
      scf.yield %38, %36 : vector<8x32xf32>, vector<8x32xf32>
    }
    %c3_i32_5 = arith.constant 3 : i32
    %c0_6 = arith.constant 0 : index
    %c0_7 = arith.constant 0 : index
    %5 = vector.load %arg5[%c0_6, %c0_7] : memref<8x32xf32, #tpu.memory_space<vmem>>, vector<8x32xf32>
    tpu.vector_store %arg5[%c0_6, %c0_7], %4#0 {strides = array<i32>} : memref<8x32xf32, #tpu.memory_space<vmem>>, vector<8x32xf32>,
    %c0_8 = arith.constant 0 : index
    %c0_9 = arith.constant 0 : index
    %6 = vector.load %arg6[%c0_8, %c0_9] : memref<8x32xf32, #tpu.memory_space<vmem>>, vector<8x32xf32>
    tpu.vector_store %arg6[%c0_8, %c0_9], %4#1 {strides = array<i32>} : memref<8x32xf32, #tpu.memory_space<vmem>>, vector<8x32xf32>,
    return
  }
}

</mosaic_0001>

<llo_original>
// kernel: tile.23
$region0: #{tile.23}
  #allocation0 [shape = 's32[1]{0}', space=sflag, size = 0x4, scoped, tag = 'scoped memory for tile.23']
  %s0 = inlined_call_operand.vmem [shape: f32[32], index: 0, kind: input, shape index: {}]
  %s1 = inlined_call_operand.vmem [shape: f32[4,32], index: 1, kind: output, shape index: {}]
  // Predicated region
  $region2: #{tile.23} parent=0 // pred_check
    _
  $region3: #{tile.23} parent=0 // pred_check_branch
    %3 = sbr.rel (0) target = $region5
  $region4: #{tile.23} parent=0 // pred_region
    _
  $region5: #{tile.23} parent=0 // pred_fallthru
    _
  %v4 = vld [vmem:[%s0] ss:$0 sm:$0xff]
  %5 = vst [vmem:[%s1] sm:$0xf] %v4

// kernel: tile.24
$region0: #{tile.24}
  %s0 = inlined_call_operand.vmem [shape: f32[4,32], index: 0, kind: input, shape index: {}]
  %s1 = inlined_call_operand.hbm [shape: f32[1,128], index: 1, kind: output, shape index: {}]
  $region1: #{tile.24} parent=0
    #allocation0 [shape = 'u8[512]{0}', space=vmem, size = 0x400, scoped, tag = 'operand span for operand 1']
    #allocation1 [shape = 's32[1]{0}', space=sflag, size = 0x4, scoped, tag = 'scoped memory for tile.24']
    #allocation2 [shape = 'u8[4096]{0}', space=vmem, size = 0x1000, scoped, tag = 'scoped mem for output reshape']
    #allocation3 [shape = 'u8[4096]{0}', space=vmem, size = 0x1000, scoped, tag = 'scoped mem for input reshape']
    %2 = vsyncpa [#allocation1], 0
    %s4 = sshllo.u32 0, 4
    %v5 = vld [vmem:[%s0] sm:%s4]
    %6 = vst [vmem:[#allocation3] sm:%s4] %v5
    %v7 = vld [vmem:[#allocation3] sm:$0x1]
    %vm8 = vcmask 261120
    %9 = vst.msk [vmem:[#allocation2] sm:$0x1] %vm8, %v7
    %s10 = scalar_lea.vmem [#allocation3], 3
    %v11 = vld [vmem:[%s10] sm:$0x1]
    %12 = vrot.lane.b32.xlu0 %v11, 96
    %v13 = vpop.permute.xlu0 %12
    %vm14 = vcmask 1048320
    %15 = vst.msk [vmem:[#allocation2] sm:$0x1] %vm14, %v13
    %s16 = scalar_lea.vmem [#allocation3], 2
    %v17 = vld [vmem:[%s16] sm:$0x1]
    %18 = vrot.lane.b32.xlu0 %v17, 64
    %v19 = vpop.permute.xlu0 %18
    %vm20 = vcmask 785920
    %21 = vst.msk [vmem:[#allocation2] sm:$0x1] %vm20, %v19
    %s22 = scalar_lea.vmem [#allocation3], 1
    %v23 = vld [vmem:[%s22] sm:$0x1]
    %24 = vrot.lane.b32.xlu0 %v23, 32
    %v25 = vpop.permute.xlu0 %24
    %vm26 = vcmask 523520
    %27 = vst.msk [vmem:[#allocation2] sm:$0x1] %vm26, %v25
    %s29 = sshllo.u32 0, 1
    %v31 = vld [vmem:[#allocation2] sm:%s29]
    %s32 = sshllo.u32 0, 1
    %33 = vst [vmem:[#allocation0] sm:%s32] %v31
    %s35 = ssub.s32 16, 16
    %36 = vsyncadd [#allocation1], %s35
    %s38 = sshll.u32 [#allocation0], 4
    %s39 = int_to_ptr.vmem [resolvable:$true] %s38
    %41 = dma.vmem_to_hbm [thread:$0]  %s39, 16, %s1, [#allocation1]
    %42 = dma.done [#allocation1], 16
    %43 = vsyncpa [#allocation1], 1

// kernel: drqn_forward.6
$region0: #{drqn_forward.6}
  #allocation0 [shape = 'u32[]', space=smem, size = 0x4, offset = 0x4, fixed_abs, tag = 'smem constant byte address 0x4 - core index']
  #allocation1 [shape = 'u32[144,128]{1,0:T(1,128)}', space=vmem, size = 0x12000, scoped, tag = 'internal scratch']
  %s0 = inlined_call_operand.hbm [shape: bf16[224,256], index: 0, kind: input, shape index: {}]
  %s1 = inlined_call_operand.hbm [shape: bf16[256,32], index: 1, kind: input, shape index: {}]
  %s2 = inlined_call_operand.hbm [shape: bf16[224,32], index: 2, kind: output, shape index: {0}]
  %s3 = inlined_call_operand.hbm [shape: f32[2,1,32], index: 3, kind: output, shape index: {1}]
  %s4 = inlined_call_operand.hbm [shape: f32[2,1,32], index: 4, kind: output, shape index: {2}]
  %5 = xla_tuple %s2, %s3, %s4
  %s6 = sld [smem:[#allocation0]]
  $region65: #{drqn_forward.6} parent=0
    _
  %s8 = ssub.s32 1, %s6
  %s9 = scalar_select 0, %s8, %s6
  $region1: #{drqn_forward.6} parent=0
    #allocation2 [shape = 'u8[114688]{0}', space=vmem, size = 0x1c000, scoped, tag = 'input window, operand 0']
    #allocation3 [shape = 's32[2]{0}', space=sflag, size = 0x8, scoped, tag = 'scoped memory for drqn_forward.6']
    #allocation4 [shape = 's32[2]{0}', space=sflag, size = 0x8, scoped, tag = 'scoped memory for drqn_forward.6']
    #allocation5 [shape = 'u8[65536]{0}', space=vmem, size = 0x10000, scoped, tag = 'input window, operand 1, single buffered']
    #allocation6 [shape = 's32[1]{0}', space=sflag, size = 0x4, scoped, tag = 'scoped memory for drqn_forward.6']
    #allocation7 [shape = 'u8[57344]{0}', space=vmem, size = 0xe000, scoped, tag = 'output window, operand 0']
    #allocation8 [shape = 'u8[1024]{0}', space=vmem, size = 0x400, scoped, tag = 'output window, operand 1']
    #allocation9 [shape = 's32[2]{0}', space=sflag, size = 0x8, scoped, tag = 'scoped memory for drqn_forward.6']
    #allocation10 [shape = 'u8[1024]{0}', space=vmem, size = 0x400, scoped, tag = 'output window, operand 2']
    %10 = vsyncpa [#allocation3], 0
    %s11 = scalar_lea.sflag [#allocation3], 1
    %12 = vsyncpa %s11, 0
    %13 = vsyncpa [#allocation6], 0
    %14 = vsyncpa [#allocation4], 0
    %s15 = scalar_lea.sflag [#allocation4], 1
    %16 = vsyncpa %s15, 0
    %17 = vsyncpa [#allocation9], 0
    %s18 = scalar_lea.sflag [#allocation9], 1
    %19 = vsyncpa %s18, 0
    loop: start=0, step=1, limit=4
    $region2: #{drqn_forward.6} parent=1 // loop_pre_header
      _
    $region3: #{drqn_forward.6} parent=1 // loop_header
      %s21 = sphi 0, %s25
      %p22 = scmp.ge.s32.totalorder %s21, 4
      %s31 = sphi 0, %s33
      %s34 = sphi 0, %s31
      %s35 = sphi 0, %s34
      %s51 = sphi 0, %s35
      %s55 = sphi 0, %s55
      %s57 = sphi 0, %s55
      %s58 = sphi 0, %s57
      %s72 = sphi 0, %s58
      %s78 = sphi 0, %s80
      %s81 = sphi 0, %s78
      %s82 = sphi 0, %s81
      %s98 = sphi 0, %s82
      %s104 = sphi 0, %s106
      %s107 = sphi 0, %s104
      %s108 = sphi 0, %s107
      %s124 = sphi 0, %s108
      %s130 = sphi 0, %s132
      %s133 = sphi 0, %s130
      %s134 = sphi 0, %s133
      %s150 = sphi 0, %s134
    $region4: #{drqn_forward.6} parent=1 // loop_header_branch
      %24 = sbr.rel (%p22) target = $region8
    $region5: #{drqn_forward.6} parent=1 // loop_body
      %s26 = ssub.s32 %s21, 1
      %s27 = ssub.s32 %s21, 2
      %s28 = sadd.s32 %s21, 1
      %s29 = ssub.s32 %s21, %s28
      %p30 = scmp.eq.s32.totalorder %s29, 0
      %s32 = sadd.s32 %s31, 1
      %s33 = scalar_select %p30, %s31, %s32
      %p36 = pneg %p30
      %p37 = scmp.eq.s32.totalorder %s21, 1
      %p38 = por %p36, %p37
      %p39 = scmp.ne.s32.totalorder %s31, %s34
      %p40 = scmp.eq.s32.totalorder %s21, 0
      %p41 = por %p39, %p40
      %p42 = scmp.ne.s32.totalorder %s31, %s34
      %p43 = scmp.eq.s32.totalorder %s26, 1
      %p44 = por %p42, %p43
      %p45 = scmp.ne.s32.totalorder %s34, %s35
      %p46 = scmp.eq.s32.totalorder %s26, 0
      %p47 = por %p45, %p46
      %p48 = scmp.ne.s32.totalorder %s34, %s35
      %p49 = scmp.eq.s32.totalorder %s27, 1
      %p50 = por %p48, %p49
      %p52 = scmp.ne.s32.totalorder %s35, %s51
      %p53 = scmp.eq.s32.totalorder %s27, 0
      %p54 = por %p52, %p53
      %s56 = sadd.s32 %s55, 1
      %p59 = scmp.eq.s32.totalorder %s21, 1
      %p60 = scmp.ne.s32.totalorder %s55, %s57
      %p61 = scmp.eq.s32.totalorder %s21, 0
      %p62 = por %p60, %p61
      %p63 = scmp.ne.s32.totalorder %s55, %s57
      %p64 = scmp.eq.s32.totalorder %s26, 1
      %p65 = por %p63, %p64
      %p66 = scmp.ne.s32.totalorder %s57, %s58
      %p67 = scmp.eq.s32.totalorder %s26, 0
      %p68 = por %p66, %p67
      %p69 = scmp.ne.s32.totalorder %s57, %s58
      %p70 = scmp.eq.s32.totalorder %s27, 1
      %p71 = por %p69, %p70
      %p73 = scmp.ne.s32.totalorder %s58, %s72
      %p74 = scmp.eq.s32.totalorder %s27, 0
      %p75 = por %p73, %p74
      %s76 = ssub.s32 %s21, %s28
      %p77 = scmp.eq.s32.totalorder %s76, 0
      %s79 = sadd.s32 %s78, 1
      %s80 = scalar_select %p77, %s78, %s79
      %p83 = pneg %p77
      %p84 = scmp.eq.s32.totalorder %s21, 1
      %p85 = por %p83, %p84
      %p86 = scmp.ne.s32.totalorder %s78, %s81
      %p87 = scmp.eq.s32.totalorder %s21, 0
      %p88 = por %p86, %p87
      %p89 = scmp.ne.s32.totalorder %s78, %s81
      %p90 = scmp.eq.s32.totalorder %s26, 1
      %p91 = por %p89, %p90
      %p92 = scmp.ne.s32.totalorder %s81, %s82
      %p93 = scmp.eq.s32.totalorder %s26, 0
      %p94 = por %p92, %p93
      %p95 = scmp.ne.s32.totalorder %s81, %s82
      %p96 = scmp.eq.s32.totalorder %s27, 1
      %p97 = por %p95, %p96
      %p99 = scmp.ne.s32.totalorder %s82, %s98
      %p100 = scmp.eq.s32.totalorder %s27, 0
      %p101 = por %p99, %p100
      %s102 = ssub.s32 %s21, %s28
      %p103 = scmp.eq.s32.totalorder %s102, 0
      %s105 = sadd.s32 %s104, 1
      %s106 = scalar_select %p103, %s104, %s105
      %p109 = pneg %p103
      %p110 = scmp.eq.s32.totalorder %s21, 1
      %p111 = por %p109, %p110
      %p112 = scmp.ne.s32.totalorder %s104, %s107
      %p113 = scmp.eq.s32.totalorder %s21, 0
      %p114 = por %p112, %p113
      %p115 = scmp.ne.s32.totalorder %s104, %s107
      %p116 = scmp.eq.s32.totalorder %s26, 1
      %p117 = por %p115, %p116
      %p118 = scmp.ne.s32.totalorder %s107, %s108
      %p119 = scmp.eq.s32.totalorder %s26, 0
      %p120 = por %p118, %p119
      %p121 = scmp.ne.s32.totalorder %s107, %s108
      %p122 = scmp.eq.s32.totalorder %s27, 1
      %p123 = por %p121, %p122
      %p125 = scmp.ne.s32.totalorder %s108, %s124
      %p126 = scmp.eq.s32.totalorder %s27, 0
      %p127 = por %p125, %p126
      %s128 = ssub.s32 %s21, %s28
      %p129 = scmp.eq.s32.totalorder %s128, 0
      %s131 = sadd.s32 %s130, 1
      %s132 = scalar_select %p129, %s130, %s131
      %p135 = pneg %p129
      %p136 = scmp.eq.s32.totalorder %s21, 1
      %p137 = por %p135, %p136
      %p138 = scmp.ne.s32.totalorder %s130, %s133
      %p139 = scmp.eq.s32.totalorder %s21, 0
      %p140 = por %p138, %p139
      %p141 = scmp.ne.s32.totalorder %s130, %s133
      %p142 = scmp.eq.s32.totalorder %s26, 1
      %p143 = por %p141, %p142
      %p144 = scmp.ne.s32.totalorder %s133, %s134
      %p145 = scmp.eq.s32.totalorder %s26, 0
      %p146 = por %p144, %p145
      %p147 = scmp.ne.s32.totalorder %s133, %s134
      %p148 = scmp.eq.s32.totalorder %s27, 1
      %p149 = por %p147, %p148
      %p151 = scmp.ne.s32.totalorder %s134, %s150
      %p152 = scmp.eq.s32.totalorder %s27, 0
      %p153 = por %p151, %p152
      %p154 = scmp.le.s32.totalorder 1, %s21
      %p155 = scmp.lt.s32.totalorder %s21, 3
      %p156 = pnand %p154, %p155
      %p157 = pneg %p156
      // Predicated region
      $region9: #{drqn_forward.6} parent=5 // pred_check
        _
      $region10: #{drqn_forward.6} parent=5 // pred_check_branch
        %159 = sbr.rel (%p156) target = $region12
      $region11: #{drqn_forward.6} parent=5 // pred_region
        %s160 = ssub.s32 %s21, 1
        // Predicated region
        $region13: #{drqn_forward.6} parent=11 // pred_check
          %p161 = pneg %p68
        $region14: #{drqn_forward.6} parent=11 // pred_check_branch
          %163 = sbr.rel (%p161) target = $region16
        $region15: #{drqn_forward.6} parent=11 // pred_region
          %s165 = ssub.s32 2048, 2048
          %166 = vsyncadd [#allocation6], %s165
          %s167 = sshll.u32 [#allocation5], 4
          %s168 = int_to_ptr.vmem [resolvable:$true] %s167
          %173 = dma.hbm_to_vmem [thread:$0]  %s1, 2048, %s168, [#allocation6], 64, 64, 4
        $region16: #{drqn_forward.6} parent=11 // pred_fallthru
          _
      $region12: #{drqn_forward.6} parent=5 // pred_fallthru
        _
      %p174 = scmp.lt.s32.totalorder %s21, 2
      // Predicated region
      $region17: #{drqn_forward.6} parent=5 // pred_check
        %p175 = pneg %p174
      $region18: #{drqn_forward.6} parent=5 // pred_check_branch
        %177 = sbr.rel (%p175) target = $region20
      $region19: #{drqn_forward.6} parent=5 // pred_region
        // Predicated region
        $region21: #{drqn_forward.6} parent=19 // pred_check
          %p178 = pneg %p41
        $region22: #{drqn_forward.6} parent=19 // pred_check_branch
          %180 = sbr.rel (%p178) target = $region24
        $region23: #{drqn_forward.6} parent=19 // pred_region
          %s181 = sand.u32 %s31, 1
          %s182 = scalar_lea.sflag [#allocation3], %s181
          %s183 = sand.u32 %s31, 1
          %s184 = smul.addr %s183, 112
          %s185 = scalar_lea.vmem [#allocation2], %s184
          %s186 = smul.u32 14, %s21
          %s188 = ssub.s32 1792, 1792
          %189 = vsyncadd %s182, %s188
          %s190 = smul.addr %s186, 2
          %s191 = smul.addr %s190, 64
          %s192 = scalar_lea.hbm %s0, %s191
          %s193 = sshll.u32 %s185, 4
          %s194 = int_to_ptr.vmem [resolvable:$true] %s193
          %199 = dma.hbm_to_vmem [thread:$0]  %s192, 1792, %s194, %s182, 128, 128, 8
        $region24: #{drqn_forward.6} parent=19 // pred_fallthru
          _
      $region20: #{drqn_forward.6} parent=5 // pred_fallthru
        _
      %p200 = scmp.le.s32.totalorder 1, %s21
      %p201 = scmp.lt.s32.totalorder %s21, 3
      %p202 = pnand %p200, %p201
      %p203 = pneg %p202
      // Predicated region
      $region25: #{drqn_forward.6} parent=5 // pred_check
        _
      $region26: #{drqn_forward.6} parent=5 // pred_check_branch
        %205 = sbr.rel (%p202) target = $region28
      $region27: #{drqn_forward.6} parent=5 // pred_region
        %s206 = ssub.s32 %s21, 1
        %s207 = sand.u32 %s34, 1
        %s208 = scalar_lea.sflag [#allocation3], %s207
        %s209 = sand.u32 %s34, 1
        %s210 = smul.addr %s209, 112
        %s211 = scalar_lea.vmem [#allocation2], %s210
        // Predicated region
        $region29: #{drqn_forward.6} parent=27 // pred_check
          %p212 = pneg %p47
        $region30: #{drqn_forward.6} parent=27 // pred_check_branch
          %214 = sbr.rel (%p212) target = $region32
        $region31: #{drqn_forward.6} parent=27 // pred_region
          %215 = dma.done %s208, 1792
        $region32: #{drqn_forward.6} parent=27 // pred_fallthru
          _
        // Predicated region
        $region33: #{drqn_forward.6} parent=27 // pred_check
          %p216 = pneg %p68
        $region34: #{drqn_forward.6} parent=27 // pred_check_branch
          %218 = sbr.rel (%p216) target = $region36
        $region35: #{drqn_forward.6} parent=27 // pred_region
          %219 = dma.done [#allocation6], 2048
        $region36: #{drqn_forward.6} parent=27 // pred_fallthru
          _
        %s220 = sand.u32 %s34, 1
        %s221 = scalar_lea.sflag [#allocation3], %s220
        %s222 = sand.u32 %s34, 1
        %s223 = smul.addr %s222, 112
        %s224 = scalar_lea.vmem [#allocation2], %s223
        %p225 = pneg %p47
        %p226 = pneg %p44
        %p227 = pneg %p68
        %p228 = pneg %p65
        %p229 = pneg %p94
        %p230 = pneg %p91
        %s231 = sand.u32 %s81, 1
        %s232 = scalar_lea.sflag [#allocation4], %s231
        %s233 = sand.u32 %s81, 1
        %s234 = smul.addr %s233, 56
        %s235 = scalar_lea.vmem [#allocation7], %s234
        %p236 = pneg %p120
        %p237 = pneg %p117
        %s238 = sand.u32 %s26, 1
        %s239 = scalar_lea.sflag [#allocation9], %s238
        %s240 = sand.u32 %s107, 1
        %s241 = scalar_lea.vmem [#allocation8], %s240
        %p242 = pneg %p146
        %p243 = pneg %p143
        %s244 = sand.u32 %s26, 1
        %s245 = scalar_lea.sflag [#allocation9], %s244
        %s246 = sand.u32 %s133, 1
        %s247 = scalar_lea.vmem [#allocation10], %s246
        %s248 = smul.u32 14, %s26
        %s249 = smul.u32 14, %s26
        %v251 = vld [vmem:[%s211] sm:$0xff]
        %v252 = vld [vmem:[%s211 + $0x8] sm:$0xff]
        %v253 = vld [vmem:[%s211 + $0x10] sm:$0xff]
        %v254 = vld [vmem:[%s211 + $0x18] sm:$0xff]
        %v255 = vld [vmem:[%s211 + $0x20] sm:$0xff]
        %v256 = vld [vmem:[%s211 + $0x28] sm:$0xff]
        %v257 = vld [vmem:[%s211 + $0x30] sm:$0xff]
        %v258 = vld [vmem:[%s211 + $0x38] sm:$0xff]
        %v259 = vld [vmem:[%s211 + $0x40] sm:$0xff]
        %v260 = vld [vmem:[%s211 + $0x48] sm:$0xff]
        %v261 = vld [vmem:[%s211 + $0x50] sm:$0xff]
        %v262 = vld [vmem:[%s211 + $0x58] sm:$0xff]
        %v263 = vld [vmem:[%s211 + $0x60] sm:$0xff]
        %v264 = vld [vmem:[%s211 + $0x68] sm:$0xff]
        %v265 = vld [vmem:[#allocation5] sm:$0xf]
        %v266 = vld [vmem:[#allocation5 + $0x4] sm:$0xf]
        %v267 = vld [vmem:[#allocation5 + $0x8] sm:$0xf]
        %v268 = vld [vmem:[#allocation5 + $0xc] sm:$0xf]
        %v269 = vld [vmem:[#allocation5 + $0x10] sm:$0xf]
        %v270 = vld [vmem:[#allocation5 + $0x14] sm:$0xf]
        %v271 = vld [vmem:[#allocation5 + $0x18] sm:$0xf]
        %v272 = vld [vmem:[#allocation5 + $0x1c] sm:$0xf]
        %v273 = vld [vmem:[#allocation5 + $0x20] sm:$0xf]
        %v274 = vld [vmem:[#allocation5 + $0x24] sm:$0xf]
        %v275 = vld [vmem:[#allocation5 + $0x28] sm:$0xf]
        %v276 = vld [vmem:[#allocation5 + $0x2c] sm:$0xf]
        %v277 = vld [vmem:[#allocation5 + $0x30] sm:$0xf]
        %v278 = vld [vmem:[#allocation5 + $0x34] sm:$0xf]
        %v279 = vld [vmem:[#allocation5 + $0x38] sm:$0xf]
        %v280 = vld [vmem:[#allocation5 + $0x3c] sm:$0xf]
        %v281 = vld [vmem:[#allocation5 + $0x40] sm:$0xf]
        %v282 = vld [vmem:[#allocation5 + $0x44] sm:$0xf]
        %v283 = vld [vmem:[#allocation5 + $0x48] sm:$0xf]
        %v284 = vld [vmem:[#allocation5 + $0x4c] sm:$0xf]
        %v285 = vld [vmem:[#allocation5 + $0x50] sm:$0xf]
        %v286 = vld [vmem:[#allocation5 + $0x54] sm:$0xf]
        %v287 = vld [vmem:[#allocation5 + $0x58] sm:$0xf]
        %v288 = vld [vmem:[#allocation5 + $0x5c] sm:$0xf]
        %v289 = vld [vmem:[#allocation5 + $0x60] sm:$0xf]
        %v290 = vld [vmem:[#allocation5 + $0x64] sm:$0xf]
        %v291 = vld [vmem:[#allocation5 + $0x68] sm:$0xf]
        %v292 = vld [vmem:[#allocation5 + $0x6c] sm:$0xf]
        %v293 = vld [vmem:[#allocation5 + $0x70] sm:$0xf]
        %v294 = vld [vmem:[#allocation5 + $0x74] sm:$0xf]
        %v295 = vld [vmem:[#allocation5 + $0x78] sm:$0xf]
        %v296 = vld [vmem:[#allocation5 + $0x7c] sm:$0xf]
        %v311 = vunpack.c.l.b16 %v251
        %v312 = vunpack.c.h.b16 %v251
        %v313 = vunpack.c.l.b16 %v252
        %v314 = vunpack.c.h.b16 %v252
        %v315 = vunpack.c.l.b16 %v253
        %v316 = vunpack.c.h.b16 %v253
        %v317 = vunpack.c.l.b16 %v254
        %v318 = vunpack.c.h.b16 %v254
        %v319 = vunpack.c.l.b16 %v255
        %v320 = vunpack.c.h.b16 %v255
        %v321 = vunpack.c.l.b16 %v256
        %v322 = vunpack.c.h.b16 %v256
        %v323 = vunpack.c.l.b16 %v257
        %v324 = vunpack.c.h.b16 %v257
        %v325 = vunpack.c.l.b16 %v258
        %v326 = vunpack.c.h.b16 %v258
        %v327 = vunpack.c.l.b16 %v259
        %v328 = vunpack.c.h.b16 %v259
        %v329 = vunpack.c.l.b16 %v260
        %v330 = vunpack.c.h.b16 %v260
        %v331 = vunpack.c.l.b16 %v261
        %v332 = vunpack.c.h.b16 %v261
        %v333 = vunpack.c.l.b16 %v262
        %v334 = vunpack.c.h.b16 %v262
        %v335 = vunpack.c.l.b16 %v263
        %v336 = vunpack.c.h.b16 %v263
        %v337 = vunpack.c.l.b16 %v264
        %v338 = vunpack.c.h.b16 %v264
        %v339 = vpack.c.b16 %v313, %v311
        %v340 = vpack.c.b16 %v314, %v312
        %v341 = vpack.c.b16 %v317, %v315
        %v342 = vpack.c.b16 %v318, %v316
        %v343 = vpack.c.b16 %v321, %v319
        %v344 = vpack.c.b16 %v322, %v320
        %v345 = vpack.c.b16 %v325, %v323
        %v346 = vpack.c.b16 %v326, %v324
        %v347 = vpack.c.b16 %v329, %v327
        %v348 = vpack.c.b16 %v330, %v328
        %v349 = vpack.c.b16 %v333, %v331
        %v350 = vpack.c.b16 %v334, %v332
        %v351 = vpack.c.b16 %v337, %v335
        %v352 = vpack.c.b16 %v338, %v336
        %v399 = vunpack.c.l.b16 %v265
        %v400 = vunpack.c.l.b16 %v266
        %v401 = vunpack.c.l.b16 %v267
        %v402 = vunpack.c.l.b16 %v268
        %v403 = vunpack.c.l.b16 %v269
        %v404 = vunpack.c.l.b16 %v270
        %v405 = vunpack.c.l.b16 %v271
        %v406 = vunpack.c.l.b16 %v272
        %v407 = vunpack.c.l.b16 %v273
        %v408 = vunpack.c.l.b16 %v274
        %v409 = vunpack.c.l.b16 %v275
        %v410 = vunpack.c.l.b16 %v276
        %v411 = vunpack.c.l.b16 %v277
        %v412 = vunpack.c.l.b16 %v278
        %v413 = vunpack.c.l.b16 %v279
        %v414 = vunpack.c.l.b16 %v280
        %v415 = vunpack.c.l.b16 %v281
        %v416 = vunpack.c.l.b16 %v282
        %v417 = vunpack.c.l.b16 %v283
        %v418 = vunpack.c.l.b16 %v284
        %v419 = vunpack.c.l.b16 %v285
        %v420 = vunpack.c.l.b16 %v286
        %v421 = vunpack.c.l.b16 %v287
        %v422 = vunpack.c.l.b16 %v288
        %v423 = vunpack.c.l.b16 %v289
        %v424 = vunpack.c.l.b16 %v290
        %v425 = vunpack.c.l.b16 %v291
        %v426 = vunpack.c.l.b16 %v292
        %v427 = vunpack.c.l.b16 %v293
        %v428 = vunpack.c.l.b16 %v294
        %v429 = vunpack.c.l.b16 %v295
        %v430 = vunpack.c.l.b16 %v296
        %v431 = vpack.c.b16 %v400, %v399
        %v432 = vpack.c.b16 %v402, %v401
        %v433 = vpack.c.b16 %v404, %v403
        %v434 = vpack.c.b16 %v406, %v405
        %v435 = vpack.c.b16 %v408, %v407
        %v436 = vpack.c.b16 %v410, %v409
        %v437 = vpack.c.b16 %v412, %v411
        %v438 = vpack.c.b16 %v414, %v413
        %v439 = vpack.c.b16 %v416, %v415
        %v440 = vpack.c.b16 %v418, %v417
        %v441 = vpack.c.b16 %v420, %v419
        %v442 = vpack.c.b16 %v422, %v421
        %v443 = vpack.c.b16 %v424, %v423
        %v444 = vpack.c.b16 %v426, %v425
        %v445 = vpack.c.b16 %v428, %v427
        %v446 = vpack.c.b16 %v430, %v429
        %463 = vmatprep.subr.bf16.mxu0 0
        %464 = vmatpush1.bf16.msra.mxu0 %v431
        %465 = vmatprep.subr.bf16.mxu0 0
        %466 = vmatpush1.bf16.msra.mxu0 %v432
        %467 = vmatprep.subr.bf16.mxu0 0
        %468 = vmatpush1.bf16.msra.mxu0 %v433
        %469 = vmatprep.subr.bf16.mxu0 0
        %470 = vmatpush1.bf16.msra.mxu0 %v434
        %471 = vmatprep.subr.bf16.mxu0 0
        %472 = vmatpush1.bf16.msra.mxu0 %v435
        %473 = vmatprep.subr.bf16.mxu0 0
        %474 = vmatpush1.bf16.msra.mxu0 %v436
        %475 = vmatprep.subr.bf16.mxu0 0
        %476 = vmatpush1.bf16.msra.mxu0 %v437
        %477 = vmatprep.subr.bf16.mxu0 0
        %478 = vmatpush1.bf16.msra.mxu0 %v438
        %479 = vmatprep.subr.bf16.mxu0 0
        %480 = vmatpush1.bf16.msra.mxu0 %v439
        %481 = vmatprep.subr.bf16.mxu0 0
        %482 = vmatpush1.bf16.msra.mxu0 %v440
        %483 = vmatprep.subr.bf16.mxu0 0
        %484 = vmatpush1.bf16.msra.mxu0 %v441
        %485 = vmatprep.subr.bf16.mxu0 0
        %486 = vmatpush1.bf16.msra.mxu0 %v442
        %487 = vmatprep.subr.bf16.mxu0 0
        %488 = vmatpush1.bf16.msra.mxu0 %v443
        %489 = vmatprep.subr.bf16.mxu0 0
        %490 = vmatpush1.bf16.msra.mxu0 %v444
        %491 = vmatprep.subr.bf16.mxu0 0
        %492 = vmatpush1.bf16.msra.mxu0 %v445
        %493 = vmatprep.subr.bf16.mxu0 0
        %494 = vmatpush1.bf16.msra.mxu0 %v446
        %495 = vmatprep.mubr.bf16.mxu0 %v340
        %496 = vmatmul.mubr.bf16.gmra.mrb[0].mxu0 %v339
        %v497 = vpop.f32.mrb[0].mxu0
        %v498 = vadd.f32 0.0, %v497
        %v499 = vpop.f32.mrb[0].mxu0
        %v500 = vpop.f32.mrb[0].mxu0
        %v501 = vadd.f32 0.0, %v500
        %v502 = vpop.f32.mrb[0].mxu0
        %503 = vmatprep.mubr.bf16.mxu0 %v342
        %504 = vmatmul.mubr.bf16.gmra.mrb[0].mxu0 %v341
        %v505 = vpop.f32.mrb[0].mxu0
        %v506 = vadd.f32 0.0, %v505
        %v507 = vpop.f32.mrb[0].mxu0
        %v508 = vpop.f32.mrb[0].mxu0
        %v509 = vadd.f32 0.0, %v508
        %v510 = vpop.f32.mrb[0].mxu0
        %511 = vmatprep.mubr.bf16.mxu0 %v344
        %512 = vmatmul.mubr.bf16.gmra.mrb[0].mxu0 %v343
        %v513 = vpop.f32.mrb[0].mxu0
        %v514 = vadd.f32 0.0, %v513
        %v515 = vpop.f32.mrb[0].mxu0
        %v516 = vpop.f32.mrb[0].mxu0
        %v517 = vadd.f32 0.0, %v516
        %v518 = vpop.f32.mrb[0].mxu0
        %519 = vmatprep.mubr.bf16.mxu0 %v346
        %520 = vmatmul.mubr.bf16.gmra.mrb[0].mxu0 %v345
        %v521 = vpop.f32.mrb[0].mxu0
        %v522 = vadd.f32 0.0, %v521
        %v523 = vpop.f32.mrb[0].mxu0
        %v524 = vpop.f32.mrb[0].mxu0
        %v525 = vadd.f32 0.0, %v524
        %v526 = vpop.f32.mrb[0].mxu0
        %527 = vmatprep.mubr.bf16.mxu0 %v348
        %528 = vmatmul.mubr.bf16.gmra.mrb[0].mxu0 %v347
        %v529 = vpop.f32.mrb[0].mxu0
        %v530 = vadd.f32 0.0, %v529
        %v531 = vpop.f32.mrb[0].mxu0
        %v532 = vpop.f32.mrb[0].mxu0
        %v533 = vadd.f32 0.0, %v532
        %v534 = vpop.f32.mrb[0].mxu0
        %535 = vmatprep.mubr.bf16.mxu0 %v350
        %536 = vmatmul.mubr.bf16.gmra.mrb[0].mxu0 %v349
        %v537 = vpop.f32.mrb[0].mxu0
        %v538 = vadd.f32 0.0, %v537
        %v539 = vpop.f32.mrb[0].mxu0
        %v540 = vpop.f32.mrb[0].mxu0
        %v541 = vadd.f32 0.0, %v540
        %v542 = vpop.f32.mrb[0].mxu0
        %543 = vmatprep.mubr.bf16.mxu0 %v352
        %544 = vmatmul.mubr.bf16.gmra.mrb[0].mxu0 %v351
        %v545 = vpop.f32.mrb[0].mxu0
        %v546 = vadd.f32 0.0, %v545
        %v547 = vpop.f32.mrb[0].mxu0
        %v548 = vpop.f32.mrb[0].mxu0
        %v549 = vadd.f32 0.0, %v548
        %v550 = vpop.f32.mrb[0].mxu0
        %551 = vdwg.mxu0
        %v552 = vpack.c.bf16 %v501, %v498
        %v553 = vpack.c.bf16 %v509, %v506
        %v554 = vpack.c.bf16 %v517, %v514
        %v555 = vpack.c.bf16 %v525, %v522
        %v556 = vpack.c.bf16 %v533, %v530
        %v557 = vpack.c.bf16 %v541, %v538
        %v558 = vpack.c.bf16 %v549, %v546
        %v566 = vunpack.c.l.b16 %v552
        %v567 = vunpack.c.h.b16 %v552
        %v568 = vunpack.c.l.b16 %v553
        %v569 = vunpack.c.h.b16 %v553
        %v570 = vunpack.c.l.b16 %v554
        %v571 = vunpack.c.h.b16 %v554
        %v572 = vunpack.c.l.b16 %v555
        %v573 = vunpack.c.h.b16 %v555
        %v574 = vunpack.c.l.b16 %v556
        %v575 = vunpack.c.h.b16 %v556
        %v576 = vunpack.c.l.b16 %v557
        %v577 = vunpack.c.h.b16 %v557
        %v578 = vunpack.c.l.b16 %v558
        %v579 = vunpack.c.h.b16 %v558
        %v580 = vpack.c.b16 %v566, %v566
        %v581 = vpack.c.b16 %v567, %v567
        %v582 = vpack.c.b16 %v568, %v568
        %v583 = vpack.c.b16 %v569, %v569
        %v584 = vpack.c.b16 %v570, %v570
        %v585 = vpack.c.b16 %v571, %v571
        %v586 = vpack.c.b16 %v572, %v572
        %v587 = vpack.c.b16 %v573, %v573
        %v588 = vpack.c.b16 %v574, %v574
        %v589 = vpack.c.b16 %v575, %v575
        %v590 = vpack.c.b16 %v576, %v576
        %v591 = vpack.c.b16 %v577, %v577
        %v592 = vpack.c.b16 %v578, %v578
        %v593 = vpack.c.b16 %v579, %v579
        %vm608 = vcmask 257024
        %609 = vst.msk [vmem:[%s235] sm:$0xf] %vm608, %v580
        %610 = vst.msk [vmem:[%s235 + $0x4] sm:$0xf] %vm608, %v581
        %611 = vst.msk [vmem:[%s235 + $0x8] sm:$0xf] %vm608, %v582
        %612 = vst.msk [vmem:[%s235 + $0xc] sm:$0xf] %vm608, %v583
        %613 = vst.msk [vmem:[%s235 + $0x10] sm:$0xf] %vm608, %v584
        %614 = vst.msk [vmem:[%s235 + $0x14] sm:$0xf] %vm608, %v585
        %615 = vst.msk [vmem:[%s235 + $0x18] sm:$0xf] %vm608, %v586
        %616 = vst.msk [vmem:[%s235 + $0x1c] sm:$0xf] %vm608, %v587
        %617 = vst.msk [vmem:[%s235 + $0x20] sm:$0xf] %vm608, %v588
        %618 = vst.msk [vmem:[%s235 + $0x24] sm:$0xf] %vm608, %v589
        %619 = vst.msk [vmem:[%s235 + $0x28] sm:$0xf] %vm608, %v590
        %620 = vst.msk [vmem:[%s235 + $0x2c] sm:$0xf] %vm608, %v591
        %621 = vst.msk [vmem:[%s235 + $0x30] sm:$0xf] %vm608, %v592
        %622 = vst.msk [vmem:[%s235 + $0x34] sm:$0xf] %vm608, %v593
        %vm623 = vcmask 261120
        %v624 = vsel %vm623, %v498, 0.0
        %v625 = vsel %vm623, %v501, 0.0
        %v626 = vadd.f32 %v624, %v625
        %v627 = vsel %vm623, %v506, 0.0
        %v628 = vadd.f32 %v626, %v627
        %v629 = vsel %vm623, %v509, 0.0
        %v630 = vadd.f32 %v628, %v629
        %v631 = vsel %vm623, %v514, 0.0
        %v632 = vadd.f32 %v630, %v631
        %v633 = vsel %vm623, %v517, 0.0
        %v634 = vadd.f32 %v632, %v633
        %v635 = vsel %vm623, %v522, 0.0
        %v636 = vadd.f32 %v634, %v635
        %v637 = vsel %vm623, %v525, 0.0
        %v638 = vadd.f32 %v636, %v637
        %v639 = vsel %vm623, %v530, 0.0
        %v640 = vadd.f32 %v638, %v639
        %v641 = vsel %vm623, %v533, 0.0
        %v642 = vadd.f32 %v640, %v641
        %v643 = vsel %vm623, %v538, 0.0
        %v644 = vadd.f32 %v642, %v643
        %v645 = vsel %vm623, %v541, 0.0
        %v646 = vadd.f32 %v644, %v645
        %v647 = vsel %vm623, %v546, 0.0
        %v648 = vadd.f32 %v646, %v647
        %v649 = vsel %vm623, %v549, 0.0
        %v650 = vadd.f32 %v648, %v649
        %v651 = vrot.slane %v650, 4
        %v652 = vadd.f32 %v650, %v651
        %v653 = vrot.slane %v652, 2
        %v654 = vadd.f32 %v652, %v653
        %v655 = vrot.slane %v654, 1
        %v656 = vadd.f32 %v654, %v655
        %vm657 = vcmask 253952
        %658 = vst.msk [vmem:[%s241] sm:$0x1] %vm657, %v656
        %v659 = vmul.f32 %v498, %v498
        %v660 = vmul.f32 %v501, %v501
        %v661 = vmul.f32 %v506, %v506
        %v662 = vmul.f32 %v509, %v509
        %v663 = vmul.f32 %v514, %v514
        %v664 = vmul.f32 %v517, %v517
        %v665 = vmul.f32 %v522, %v522
        %v666 = vmul.f32 %v525, %v525
        %v667 = vmul.f32 %v530, %v530
        %v668 = vmul.f32 %v533, %v533
        %v669 = vmul.f32 %v538, %v538
        %v670 = vmul.f32 %v541, %v541
        %v671 = vmul.f32 %v546, %v546
        %v672 = vmul.f32 %v549, %v549
        %v673 = vsel %vm623, %v659, 0.0
        %v674 = vsel %vm623, %v660, 0.0
        %v675 = vadd.f32 %v673, %v674
        %v676 = vsel %vm623, %v661, 0.0
        %v677 = vadd.f32 %v675, %v676
        %v678 = vsel %vm623, %v662, 0.0
        %v679 = vadd.f32 %v677, %v678
        %v680 = vsel %vm623, %v663, 0.0
        %v681 = vadd.f32 %v679, %v680
        %v682 = vsel %vm623, %v664, 0.0
        %v683 = vadd.f32 %v681, %v682
        %v684 = vsel %vm623, %v665, 0.0
        %v685 = vadd.f32 %v683, %v684
        %v686 = vsel %vm623, %v666, 0.0
        %v687 = vadd.f32 %v685, %v686
        %v688 = vsel %vm623, %v667, 0.0
        %v689 = vadd.f32 %v687, %v688
        %v690 = vsel %vm623, %v668, 0.0
        %v691 = vadd.f32 %v689, %v690
        %v692 = vsel %vm623, %v669, 0.0
        %v693 = vadd.f32 %v691, %v692
        %v694 = vsel %vm623, %v670, 0.0
        %v695 = vadd.f32 %v693, %v694
        %v696 = vsel %vm623, %v671, 0.0
        %v697 = vadd.f32 %v695, %v696
        %v698 = vsel %vm623, %v672, 0.0
        %v699 = vadd.f32 %v697, %v698
        %v700 = vrot.slane %v699, 4
        %v701 = vadd.f32 %v699, %v700
        %v702 = vrot.slane %v701, 2
        %v703 = vadd.f32 %v701, %v702
        %v704 = vrot.slane %v703, 1
        %v705 = vadd.f32 %v703, %v704
        %706 = vst.msk [vmem:[%s247] sm:$0x1] %vm657, %v705
        %s707 = sand.u32 %s81, 1
        %s708 = scalar_lea.sflag [#allocation4], %s707
        %s709 = sand.u32 %s81, 1
        %s710 = smul.addr %s709, 56
        %s711 = scalar_lea.vmem [#allocation7], %s710
        %s712 = sand.u32 %s26, 1
        %s713 = scalar_lea.sflag [#allocation9], %s712
        %s714 = sand.u32 %s107, 1
        %s715 = scalar_lea.vmem [#allocation8], %s714
        %s716 = sand.u32 %s26, 1
        %s717 = scalar_lea.sflag [#allocation9], %s716
        %s718 = sand.u32 %s133, 1
        %s719 = scalar_lea.vmem [#allocation10], %s718
        // Predicated region
        $region37: #{drqn_forward.6} parent=27 // pred_check
          %p720 = pneg %p91
        $region38: #{drqn_forward.6} parent=27 // pred_check_branch
          %722 = sbr.rel (%p720) target = $region40
        $region39: #{drqn_forward.6} parent=27 // pred_region
          %s723 = smul.u32 14, %s26
          %s725 = ssub.s32 896, 896
          %726 = vsyncadd %s708, %s725
          %s727 = smul.addr %s723, 64
          %s728 = scalar_lea.hbm %s2, %s727
          %s729 = sshll.u32 %s711, 4
          %s730 = int_to_ptr.vmem [resolvable:$true] %s729
          %735 = dma.vmem_to_hbm [thread:$0]  %s730, 896, %s728, %s708, 64, 64, 4
        $region40: #{drqn_forward.6} parent=27 // pred_fallthru
          _
        // Predicated region
        $region41: #{drqn_forward.6} parent=27 // pred_check
          %p736 = pneg %p117
        $region42: #{drqn_forward.6} parent=27 // pred_check_branch
          %738 = sbr.rel (%p736) target = $region44
        $region43: #{drqn_forward.6} parent=27 // pred_region
          %s740 = ssub.s32 16, 16
          %741 = vsyncadd %s713, %s740
          %s742 = smul.addr %s26, 16
          %s743 = scalar_lea.hbm %s3, %s742
          %s745 = sshll.u32 %s715, 4
          %s746 = int_to_ptr.vmem [resolvable:$true] %s745
          %748 = dma.vmem_to_hbm [thread:$0]  %s746, 16, %s743, %s713
        $region44: #{drqn_forward.6} parent=27 // pred_fallthru
          _
        // Predicated region
        $region45: #{drqn_forward.6} parent=27 // pred_check
          %p749 = pneg %p143
        $region46: #{drqn_forward.6} parent=27 // pred_check_branch
          %751 = sbr.rel (%p749) target = $region48
        $region47: #{drqn_forward.6} parent=27 // pred_region
          %s753 = ssub.s32 16, 16
          %754 = vsyncadd %s717, %s753
          %s755 = smul.addr %s26, 16
          %s756 = scalar_lea.hbm %s4, %s755
          %s758 = sshll.u32 %s719, 4
          %s759 = int_to_ptr.vmem [resolvable:$true] %s758
          %761 = dma.vmem_to_hbm [thread:$0]  %s759, 16, %s756, %s717
        $region48: #{drqn_forward.6} parent=27 // pred_fallthru
          _
      $region28: #{drqn_forward.6} parent=5 // pred_fallthru
        _
      %p762 = scmp.le.s32.totalorder 2, %s21
      // Predicated region
      $region49: #{drqn_forward.6} parent=5 // pred_check
        %p763 = pneg %p762
      $region50: #{drqn_forward.6} parent=5 // pred_check_branch
        %765 = sbr.rel (%p763) target = $region52
      $region51: #{drqn_forward.6} parent=5 // pred_region
        %s766 = ssub.s32 %s21, 2
        // Predicated region
        $region53: #{drqn_forward.6} parent=51 // pred_check
          %p767 = pneg %p97
        $region54: #{drqn_forward.6} parent=51 // pred_check_branch
          %769 = sbr.rel (%p767) target = $region56
        $region55: #{drqn_forward.6} parent=51 // pred_region
          %s770 = sand.u32 %s82, 1
          %s771 = scalar_lea.sflag [#allocation4], %s770
          %s772 = sand.u32 %s82, 1
          %s773 = smul.addr %s772, 56
          %s774 = scalar_lea.vmem [#allocation7], %s773
          %775 = dma.done %s771, 896
        $region56: #{drqn_forward.6} parent=51 // pred_fallthru
          _
        // Predicated region
        $region57: #{drqn_forward.6} parent=51 // pred_check
          %p776 = pneg %p123
        $region58: #{drqn_forward.6} parent=51 // pred_check_branch
          %778 = sbr.rel (%p776) target = $region60
        $region59: #{drqn_forward.6} parent=51 // pred_region
          %s779 = sand.u32 %s27, 1
          %s780 = scalar_lea.sflag [#allocation9], %s779
          %s781 = sand.u32 %s108, 1
          %s782 = scalar_lea.vmem [#allocation8], %s781
          %783 = dma.done %s780, 16
        $region60: #{drqn_forward.6} parent=51 // pred_fallthru
          _
        // Predicated region
        $region61: #{drqn_forward.6} parent=51 // pred_check
          %p784 = pneg %p149
        $region62: #{drqn_forward.6} parent=51 // pred_check_branch
          %786 = sbr.rel (%p784) target = $region64
        $region63: #{drqn_forward.6} parent=51 // pred_region
          %s787 = sand.u32 %s27, 1
          %s788 = scalar_lea.sflag [#allocation9], %s787
          %s789 = sand.u32 %s134, 1
          %s790 = scalar_lea.vmem [#allocation10], %s789
          %791 = dma.done %s788, 16
        $region64: #{drqn_forward.6} parent=51 // pred_fallthru
          _
      $region52: #{drqn_forward.6} parent=5 // pred_fallthru
        _
    $region6: #{drqn_forward.6} parent=1 // loop_footer
      %s25 = sadd.s32 1, %s21
    $region7: #{drqn_forward.6} parent=1 // loop_footer_branch
      %20 = sbr.rel target = $region3
    $region8: #{drqn_forward.6} parent=1 // loop_exit
      _
    %792 = vsyncpa [#allocation3], 1
    %s793 = scalar_lea.sflag [#allocation3], 1
    %794 = vsyncpa %s793, 1
    %795 = vsyncpa [#allocation6], 1
    %796 = vsyncpa [#allocation4], 1
    %s797 = scalar_lea.sflag [#allocation4], 1
    %798 = vsyncpa %s797, 1
    %799 = vsyncpa [#allocation9], 1
    %s800 = scalar_lea.sflag [#allocation9], 1
    %801 = vsyncpa %s800, 1

// kernel: drqn_forward.7
$region0: #{drqn_forward.7}
  #allocation0 [shape = 'u32[]', space=smem, size = 0x4, offset = 0x4, fixed_abs, tag = 'smem constant byte address 0x4 - core index']
  #allocation1 [shape = 'u32[144,128]{1,0:T(1,128)}', space=vmem, size = 0x12000, scoped, tag = 'internal scratch']
  %s0 = inlined_call_operand.hbm [shape: bf16[64,128], index: 0, kind: input, shape index: {}]
  %s1 = inlined_call_operand.hbm [shape: f32[1,128], index: 1, kind: input, shape index: {}]
  %s2 = inlined_call_operand.hbm [shape: f32[1,128], index: 2, kind: input, shape index: {}]
  %s3 = inlined_call_operand.hbm [shape: bf16[64,128], index: 3, kind: output, shape index: {}]
  %s4 = sld [smem:[#allocation0]]
  $region57: #{drqn_forward.7} parent=0
    _
  %s6 = ssub.s32 1, %s4
  %s7 = scalar_select 0, %s6, %s4
  $region1: #{drqn_forward.7} parent=0
    #allocation2 [shape = 'u8[16384]{0}', space=vmem, size = 0x4000, scoped, tag = 'input window, operand 0']
    #allocation3 [shape = 's32[2]{0}', space=sflag, size = 0x8, scoped, tag = 'scoped memory for drqn_forward.7']
    #allocation4 [shape = 's32[2]{0}', space=sflag, size = 0x8, scoped, tag = 'scoped memory for drqn_forward.7']
    #allocation5 [shape = 'u8[512]{0}', space=vmem, size = 0x400, scoped, tag = 'input window, operand 1, single buffered']
    #allocation6 [shape = 's32[1]{0}', space=sflag, size = 0x4, scoped, tag = 'scoped memory for drqn_forward.7']
    #allocation7 [shape = 'u8[512]{0}', space=vmem, size = 0x400, scoped, tag = 'input window, operand 2, single buffered']
    #allocation8 [shape = 'u8[16384]{0}', space=vmem, size = 0x4000, scoped, tag = 'output window, operand 0']
    %8 = vsyncpa [#allocation3], 0
    %s9 = scalar_lea.sflag [#allocation3], 1
    %10 = vsyncpa %s9, 0
    %11 = vsyncpa [#allocation6], 0
    %12 = vsyncpa [#allocation4], 0
    %s13 = scalar_lea.sflag [#allocation4], 1
    %14 = vsyncpa %s13, 0
    loop: start=0, step=1, limit=4
    $region2: #{drqn_forward.7} parent=1 // loop_pre_header
      _
    $region3: #{drqn_forward.7} parent=1 // loop_header
      %s16 = sphi 0, %s20
      %p17 = scmp.ge.s32.totalorder %s16, 4
      %s26 = sphi 0, %s28
      %s29 = sphi 0, %s26
      %s30 = sphi 0, %s29
      %s46 = sphi 0, %s30
      %s50 = sphi 0, %s50
      %s52 = sphi 0, %s50
      %s53 = sphi 0, %s52
      %s67 = sphi 0, %s53
      %s71 = sphi 0, %s71
      %s73 = sphi 0, %s71
      %s74 = sphi 0, %s73
      %s88 = sphi 0, %s74
      %s94 = sphi 0, %s96
      %s97 = sphi 0, %s94
      %s98 = sphi 0, %s97
      %s114 = sphi 0, %s98
    $region4: #{drqn_forward.7} parent=1 // loop_header_branch
      %19 = sbr.rel (%p17) target = $region8
    $region5: #{drqn_forward.7} parent=1 // loop_body
      %s21 = ssub.s32 %s16, 1
      %s22 = ssub.s32 %s16, 2
      %s23 = sadd.s32 %s16, 1
      %s24 = ssub.s32 %s16, %s23
      %p25 = scmp.eq.s32.totalorder %s24, 0
      %s27 = sadd.s32 %s26, 1
      %s28 = scalar_select %p25, %s26, %s27
      %p31 = pneg %p25
      %p32 = scmp.eq.s32.totalorder %s16, 1
      %p33 = por %p31, %p32
      %p34 = scmp.ne.s32.totalorder %s26, %s29
      %p35 = scmp.eq.s32.totalorder %s16, 0
      %p36 = por %p34, %p35
      %p37 = scmp.ne.s32.totalorder %s26, %s29
      %p38 = scmp.eq.s32.totalorder %s21, 1
      %p39 = por %p37, %p38
      %p40 = scmp.ne.s32.totalorder %s29, %s30
      %p41 = scmp.eq.s32.totalorder %s21, 0
      %p42 = por %p40, %p41
      %p43 = scmp.ne.s32.totalorder %s29, %s30
      %p44 = scmp.eq.s32.totalorder %s22, 1
      %p45 = por %p43, %p44
      %p47 = scmp.ne.s32.totalorder %s30, %s46
      %p48 = scmp.eq.s32.totalorder %s22, 0
      %p49 = por %p47, %p48
      %s51 = sadd.s32 %s50, 1
      %p54 = scmp.eq.s32.totalorder %s16, 1
      %p55 = scmp.ne.s32.totalorder %s50, %s52
      %p56 = scmp.eq.s32.totalorder %s16, 0
      %p57 = por %p55, %p56
      %p58 = scmp.ne.s32.totalorder %s50, %s52
      %p59 = scmp.eq.s32.totalorder %s21, 1
      %p60 = por %p58, %p59
      %p61 = scmp.ne.s32.totalorder %s52, %s53
      %p62 = scmp.eq.s32.totalorder %s21, 0
      %p63 = por %p61, %p62
      %p64 = scmp.ne.s32.totalorder %s52, %s53
      %p65 = scmp.eq.s32.totalorder %s22, 1
      %p66 = por %p64, %p65
      %p68 = scmp.ne.s32.totalorder %s53, %s67
      %p69 = scmp.eq.s32.totalorder %s22, 0
      %p70 = por %p68, %p69
      %s72 = sadd.s32 %s71, 1
      %p75 = scmp.eq.s32.totalorder %s16, 1
      %p76 = scmp.ne.s32.totalorder %s71, %s73
      %p77 = scmp.eq.s32.totalorder %s16, 0
      %p78 = por %p76, %p77
      %p79 = scmp.ne.s32.totalorder %s71, %s73
      %p80 = scmp.eq.s32.totalorder %s21, 1
      %p81 = por %p79, %p80
      %p82 = scmp.ne.s32.totalorder %s73, %s74
      %p83 = scmp.eq.s32.totalorder %s21, 0
      %p84 = por %p82, %p83
      %p85 = scmp.ne.s32.totalorder %s73, %s74
      %p86 = scmp.eq.s32.totalorder %s22, 1
      %p87 = por %p85, %p86
      %p89 = scmp.ne.s32.totalorder %s74, %s88
      %p90 = scmp.eq.s32.totalorder %s22, 0
      %p91 = por %p89, %p90
      %s92 = ssub.s32 %s16, %s23
      %p93 = scmp.eq.s32.totalorder %s92, 0
      %s95 = sadd.s32 %s94, 1
      %s96 = scalar_select %p93, %s94, %s95
      %p99 = pneg %p93
      %p100 = scmp.eq.s32.totalorder %s16, 1
      %p101 = por %p99, %p100
      %p102 = scmp.ne.s32.totalorder %s94, %s97
      %p103 = scmp.eq.s32.totalorder %s16, 0
      %p104 = por %p102, %p103
      %p105 = scmp.ne.s32.totalorder %s94, %s97
      %p106 = scmp.eq.s32.totalorder %s21, 1
      %p107 = por %p105, %p106
      %p108 = scmp.ne.s32.totalorder %s97, %s98
      %p109 = scmp.eq.s32.totalorder %s21, 0
      %p110 = por %p108, %p109
      %p111 = scmp.ne.s32.totalorder %s97, %s98
      %p112 = scmp.eq.s32.totalorder %s22, 1
      %p113 = por %p111, %p112
      %p115 = scmp.ne.s32.totalorder %s98, %s114
      %p116 = scmp.eq.s32.totalorder %s22, 0
      %p117 = por %p115, %p116
      %p118 = scmp.le.s32.totalorder 1, %s16
      %p119 = scmp.lt.s32.totalorder %s16, 3
      %p120 = pnand %p118, %p119
      %p121 = pneg %p120
      // Predicated region
      $region9: #{drqn_forward.7} parent=5 // pred_check
        _
      $region10: #{drqn_forward.7} parent=5 // pred_check_branch
        %123 = sbr.rel (%p120) target = $region12
      $region11: #{drqn_forward.7} parent=5 // pred_region
        %s124 = ssub.s32 %s16, 1
        // Predicated region
        $region13: #{drqn_forward.7} parent=11 // pred_check
          %p125 = pneg %p63
        $region14: #{drqn_forward.7} parent=11 // pred_check_branch
          %127 = sbr.rel (%p125) target = $region16
        $region15: #{drqn_forward.7} parent=11 // pred_region
          %s129 = ssub.s32 16, 16
          %130 = vsyncadd [#allocation6], %s129
          %s132 = sshll.u32 [#allocation5], 4
          %s133 = int_to_ptr.vmem [resolvable:$true] %s132
          %135 = dma.hbm_to_vmem [thread:$0]  %s1, 16, %s133, [#allocation6]
        $region16: #{drqn_forward.7} parent=11 // pred_fallthru
          _
        // Predicated region
        $region17: #{drqn_forward.7} parent=11 // pred_check
          %p136 = pneg %p84
        $region18: #{drqn_forward.7} parent=11 // pred_check_branch
          %138 = sbr.rel (%p136) target = $region20
        $region19: #{drqn_forward.7} parent=11 // pred_region
          %s140 = ssub.s32 16, 16
          %141 = vsyncadd [#allocation6], %s140
          %s143 = sshll.u32 [#allocation7], 4
          %s144 = int_to_ptr.vmem [resolvable:$true] %s143
          %146 = dma.hbm_to_vmem [thread:$0]  %s2, 16, %s144, [#allocation6]
        $region20: #{drqn_forward.7} parent=11 // pred_fallthru
          _
      $region12: #{drqn_forward.7} parent=5 // pred_fallthru
        _
      %p147 = scmp.lt.s32.totalorder %s16, 2
      // Predicated region
      $region21: #{drqn_forward.7} parent=5 // pred_check
        %p148 = pneg %p147
      $region22: #{drqn_forward.7} parent=5 // pred_check_branch
        %150 = sbr.rel (%p148) target = $region24
      $region23: #{drqn_forward.7} parent=5 // pred_region
        // Predicated region
        $region25: #{drqn_forward.7} parent=23 // pred_check
          %p151 = pneg %p36
        $region26: #{drqn_forward.7} parent=23 // pred_check_branch
          %153 = sbr.rel (%p151) target = $region28
        $region27: #{drqn_forward.7} parent=23 // pred_region
          %s154 = sand.u32 %s26, 1
          %s155 = scalar_lea.sflag [#allocation3], %s154
          %s156 = sand.u32 %s26, 1
          %s157 = smul.addr %s156, 16
          %s158 = scalar_lea.vmem [#allocation2], %s157
          %s159 = smul.u32 4, %s16
          %s161 = ssub.s32 256, 256
          %162 = vsyncadd %s155, %s161
          %s163 = smul.addr %s159, 64
          %s164 = scalar_lea.hbm %s0, %s163
          %s165 = sshll.u32 %s158, 4
          %s166 = int_to_ptr.vmem [resolvable:$true] %s165
          %171 = dma.hbm_to_vmem [thread:$0]  %s164, 256, %s166, %s155, 64, 64, 4
        $region28: #{drqn_forward.7} parent=23 // pred_fallthru
          _
      $region24: #{drqn_forward.7} parent=5 // pred_fallthru
        _
      %p172 = scmp.le.s32.totalorder 1, %s16
      %p173 = scmp.lt.s32.totalorder %s16, 3
      %p174 = pnand %p172, %p173
      %p175 = pneg %p174
      // Predicated region
      $region29: #{drqn_forward.7} parent=5 // pred_check
        _
      $region30: #{drqn_forward.7} parent=5 // pred_check_branch
        %177 = sbr.rel (%p174) target = $region32
      $region31: #{drqn_forward.7} parent=5 // pred_region
        %s178 = ssub.s32 %s16, 1
        %s179 = sand.u32 %s29, 1
        %s180 = scalar_lea.sflag [#allocation3], %s179
        %s181 = sand.u32 %s29, 1
        %s182 = smul.addr %s181, 16
        %s183 = scalar_lea.vmem [#allocation2], %s182
        // Predicated region
        $region33: #{drqn_forward.7} parent=31 // pred_check
          %p184 = pneg %p42
        $region34: #{drqn_forward.7} parent=31 // pred_check_branch
          %186 = sbr.rel (%p184) target = $region36
        $region35: #{drqn_forward.7} parent=31 // pred_region
          %187 = dma.done %s180, 256
        $region36: #{drqn_forward.7} parent=31 // pred_fallthru
          _
        // Predicated region
        $region37: #{drqn_forward.7} parent=31 // pred_check
          %p188 = pneg %p63
        $region38: #{drqn_forward.7} parent=31 // pred_check_branch
          %190 = sbr.rel (%p188) target = $region40
        $region39: #{drqn_forward.7} parent=31 // pred_region
          %191 = dma.done [#allocation6], 16
        $region40: #{drqn_forward.7} parent=31 // pred_fallthru
          _
        // Predicated region
        $region41: #{drqn_forward.7} parent=31 // pred_check
          %p192 = pneg %p84
        $region42: #{drqn_forward.7} parent=31 // pred_check_branch
          %194 = sbr.rel (%p192) target = $region44
        $region43: #{drqn_forward.7} parent=31 // pred_region
          %195 = dma.done [#allocation6], 16
        $region44: #{drqn_forward.7} parent=31 // pred_fallthru
          _
        %s196 = sand.u32 %s29, 1
        %s197 = scalar_lea.sflag [#allocation3], %s196
        %s198 = sand.u32 %s29, 1
        %s199 = smul.addr %s198, 16
        %s200 = scalar_lea.vmem [#allocation2], %s199
        %p201 = pneg %p42
        %p202 = pneg %p39
        %p203 = pneg %p63
        %p204 = pneg %p60
        %p205 = pneg %p84
        %p206 = pneg %p81
        %p207 = pneg %p110
        %p208 = pneg %p107
        %s209 = sand.u32 %s97, 1
        %s210 = scalar_lea.sflag [#allocation4], %s209
        %s211 = sand.u32 %s97, 1
        %s212 = smul.addr %s211, 16
        %s213 = scalar_lea.vmem [#allocation8], %s212
        %s214 = smul.u32 4, %s21
        %s215 = smul.u32 4, %s21
        %v216 = vld [vmem:[%s183] sm:$0xf]
        %v217 = vld [vmem:[%s183 + $0x4] sm:$0xf]
        %v218 = vld [vmem:[%s183 + $0x8] sm:$0xf]
        %v219 = vld [vmem:[%s183 + $0xc] sm:$0xf]
        %v220 = vunpack.c.l.bf16 %v216
        %v221 = vunpack.c.l.bf16 %v217
        %v222 = vunpack.c.l.bf16 %v218
        %v223 = vunpack.c.l.bf16 %v219
        %v224 = vld [vmem:[#allocation5] sm:$0x1]
        %v226 = vlaneseq
        %v227 = vshrl.u32 %v226, 7
        %v228 = vsub.s32 0, %v227
        %v229 = vrot.slane %v224, %v228
        %v231 = vmul.f32 %v220, %v229
        %v232 = vmul.f32 %v221, %v229
        %v233 = vmul.f32 %v222, %v229
        %v234 = vmul.f32 %v223, %v229
        %v235 = vld [vmem:[#allocation7] sm:$0x1]
        %v237 = vlaneseq
        %v238 = vshrl.u32 %v237, 7
        %v239 = vsub.s32 0, %v238
        %v240 = vrot.slane %v235, %v239
        %v242 = vadd.f32 %v231, %v240
        %v243 = vadd.f32 %v232, %v240
        %v244 = vadd.f32 %v233, %v240
        %v245 = vadd.f32 %v234, %v240
        %v246 = vmax.f32 %v242, 0.0
        %v247 = vmax.f32 %v243, 0.0
        %v248 = vmax.f32 %v244, 0.0
        %v249 = vmax.f32 %v245, 0.0
        %v250 = vpack.c.bf16 %v247, %v246
        %v251 = vpack.c.bf16 %v249, %v248
        %v254 = vunpack.c.l.b16 %v250
        %v255 = vunpack.c.h.b16 %v250
        %v256 = vunpack.c.l.b16 %v251
        %v257 = vunpack.c.h.b16 %v251
        %v258 = vpack.c.b16 %v254, %v254
        %v259 = vpack.c.b16 %v255, %v255
        %v260 = vpack.c.b16 %v256, %v256
        %v261 = vpack.c.b16 %v257, %v257
        %266 = vst [vmem:[%s213] sm:$0xf] %v258
        %267 = vst [vmem:[%s213 + $0x4] sm:$0xf] %v259
        %268 = vst [vmem:[%s213 + $0x8] sm:$0xf] %v260
        %269 = vst [vmem:[%s213 + $0xc] sm:$0xf] %v261
        %s270 = sand.u32 %s97, 1
        %s271 = scalar_lea.sflag [#allocation4], %s270
        %s272 = sand.u32 %s97, 1
        %s273 = smul.addr %s272, 16
        %s274 = scalar_lea.vmem [#allocation8], %s273
        // Predicated region
        $region45: #{drqn_forward.7} parent=31 // pred_check
          %p275 = pneg %p107
        $region46: #{drqn_forward.7} parent=31 // pred_check_branch
          %277 = sbr.rel (%p275) target = $region48
        $region47: #{drqn_forward.7} parent=31 // pred_region
          %s278 = smul.u32 4, %s21
          %s280 = ssub.s32 256, 256
          %281 = vsyncadd %s271, %s280
          %s282 = smul.addr %s278, 64
          %s283 = scalar_lea.hbm %s3, %s282
          %s284 = sshll.u32 %s274, 4
          %s285 = int_to_ptr.vmem [resolvable:$true] %s284
          %290 = dma.vmem_to_hbm [thread:$0]  %s285, 256, %s283, %s271, 64, 64, 4
        $region48: #{drqn_forward.7} parent=31 // pred_fallthru
          _
      $region32: #{drqn_forward.7} parent=5 // pred_fallthru
        _
      %p291 = scmp.le.s32.totalorder 2, %s16
      // Predicated region
      $region49: #{drqn_forward.7} parent=5 // pred_check
        %p292 = pneg %p291
      $region50: #{drqn_forward.7} parent=5 // pred_check_branch
        %294 = sbr.rel (%p292) target = $region52
      $region51: #{drqn_forward.7} parent=5 // pred_region
        %s295 = ssub.s32 %s16, 2
        // Predicated region
        $region53: #{drqn_forward.7} parent=51 // pred_check
          %p296 = pneg %p113
        $region54: #{drqn_forward.7} parent=51 // pred_check_branch
          %298 = sbr.rel (%p296) target = $region56
        $region55: #{drqn_forward.7} parent=51 // pred_region
          %s299 = sand.u32 %s98, 1
          %s300 = scalar_lea.sflag [#allocation4], %s299
          %s301 = sand.u32 %s98, 1
          %s302 = smul.addr %s301, 16
          %s303 = scalar_lea.vmem [#allocation8], %s302
          %304 = dma.done %s300, 256
        $region56: #{drqn_forward.7} parent=51 // pred_fallthru
          _
      $region52: #{drqn_forward.7} parent=5 // pred_fallthru
        _
    $region6: #{drqn_forward.7} parent=1 // loop_footer
      %s20 = sadd.s32 1, %s16
    $region7: #{drqn_forward.7} parent=1 // loop_footer_branch
      %15 = sbr.rel target = $region3
    $region8: #{drqn_forward.7} parent=1 // loop_exit
      _
    %305 = vsyncpa [#allocation3], 1
    %s306 = scalar_lea.sflag [#allocation3], 1
    %307 = vsyncpa %s306, 1
    %308 = vsyncpa [#allocation6], 1
    %309 = vsyncpa [#allocation4], 1
    %s310 = scalar_lea.sflag [#allocation4], 1
    %311 = vsyncpa %s310, 1

// kernel: tile.33
$region0: #{tile.33}
  #allocation0 [shape = 's32[1]{0}', space=sflag, size = 0x4, scoped, tag = 'scoped memory for tile.33']
  %s0 = inlined_call_operand.vmem [shape: f32[64], index: 0, kind: input, shape index: {}]
  %s1 = inlined_call_operand.vmem [shape: f32[2,64], index: 1, kind: output, shape index: {}]
  // Predicated region
  $region2: #{tile.33} parent=0 // pred_check
    _
  $region3: #{tile.33} parent=0 // pred_check_branch
    %3 = sbr.rel (0) target = $region5
  $region4: #{tile.33} parent=0 // pred_region
    _
  $region5: #{tile.33} parent=0 // pred_fallthru
    _
  %v4 = vld [vmem:[%s0] ss:$0 sm:$0xff]
  %5 = vst [vmem:[%s1] sm:$0x3] %v4

// kernel: tile.34
$region0: #{tile.34}
  %s0 = inlined_call_operand.vmem [shape: f32[2,64], index: 0, kind: input, shape index: {}]
  %s1 = inlined_call_operand.hbm [shape: f32[1,128], index: 1, kind: output, shape index: {}]
  $region1: #{tile.34} parent=0
    #allocation0 [shape = 'u8[512]{0}', space=vmem, size = 0x400, scoped, tag = 'operand span for operand 1']
    #allocation1 [shape = 's32[1]{0}', space=sflag, size = 0x4, scoped, tag = 'scoped memory for tile.34']
    #allocation2 [shape = 'u8[4096]{0}', space=vmem, size = 0x1000, scoped, tag = 'scoped mem for output reshape']
    #allocation3 [shape = 'u8[4096]{0}', space=vmem, size = 0x1000, scoped, tag = 'scoped mem for input reshape']
    %2 = vsyncpa [#allocation1], 0
    %s4 = sshllo.u32 0, 2
    %v5 = vld [vmem:[%s0] sm:%s4]
    %6 = vst [vmem:[#allocation3] sm:%s4] %v5
    %v7 = vld [vmem:[#allocation3] sm:$0x1]
    %vm8 = vcmask 523264
    %9 = vst.msk [vmem:[#allocation2] sm:$0x1] %vm8, %v7
    %s10 = scalar_lea.vmem [#allocation3], 1
    %v11 = vld [vmem:[%s10] sm:$0x1]
    %12 = vrot.lane.b32.xlu0 %v11, 64
    %v13 = vpop.permute.xlu0 %12
    %vm14 = vcmask 1048064
    %15 = vst.msk [vmem:[#allocation2] sm:$0x1] %vm14, %v13
    %s17 = sshllo.u32 0, 1
    %v19 = vld [vmem:[#allocation2] sm:%s17]
    %s20 = sshllo.u32 0, 1
    %21 = vst [vmem:[#allocation0] sm:%s20] %v19
    %s23 = ssub.s32 16, 16
    %24 = vsyncadd [#allocation1], %s23
    %s26 = sshll.u32 [#allocation0], 4
    %s27 = int_to_ptr.vmem [resolvable:$true] %s26
    %29 = dma.vmem_to_hbm [thread:$0]  %s27, 16, %s1, [#allocation1]
    %30 = dma.done [#allocation1], 16
    %31 = vsyncpa [#allocation1], 1

// kernel: drqn_forward.8
$region0: #{drqn_forward.8}
  #allocation0 [shape = 'u32[]', space=smem, size = 0x4, offset = 0x4, fixed_abs, tag = 'smem constant byte address 0x4 - core index']
  #allocation1 [shape = 'u32[144,128]{1,0:T(1,128)}', space=vmem, size = 0x12000, scoped, tag = 'internal scratch']
  %s0 = inlined_call_operand.hbm [shape: bf16[32,512], index: 0, kind: input, shape index: {}]
  %s1 = inlined_call_operand.hbm [shape: bf16[512,64], index: 1, kind: input, shape index: {}]
  %s2 = inlined_call_operand.hbm [shape: bf16[32,64], index: 2, kind: output, shape index: {0}]
  %s3 = inlined_call_operand.hbm [shape: f32[1,1,64], index: 3, kind: output, shape index: {1}]
  %s4 = inlined_call_operand.hbm [shape: f32[1,1,64], index: 4, kind: output, shape index: {2}]
  %5 = xla_tuple %s2, %s3, %s4
  %s6 = sld [smem:[#allocation0]]
  $region42: #{drqn_forward.8} parent=0
    _
  %s8 = ssub.s32 1, %s6
  %s9 = scalar_select 0, %s8, %s6
  $region1: #{drqn_forward.8} parent=0
    #allocation2 [shape = 'u8[32768]{0}', space=vmem, size = 0x8000, scoped, tag = 'input window, operand 0, single buffered']
    #allocation3 [shape = 's32[1]{0}', space=sflag, size = 0x4, scoped, tag = 'scoped memory for drqn_forward.8']
    #allocation4 [shape = 's32[1]{0}', space=sflag, size = 0x4, scoped, tag = 'scoped memory for drqn_forward.8']
    #allocation5 [shape = 'u8[131072]{0}', space=vmem, size = 0x20000, scoped, tag = 'input window, operand 1, single buffered']
    #allocation6 [shape = 's32[1]{0}', space=sflag, size = 0x4, scoped, tag = 'scoped memory for drqn_forward.8']
    #allocation7 [shape = 'u8[8192]{0}', space=vmem, size = 0x2000, scoped, tag = 'output window, operand 0, single buffered']
    #allocation8 [shape = 'u8[512]{0}', space=vmem, size = 0x400, scoped, tag = 'output window, operand 1, single buffered']
    #allocation9 [shape = 's32[1]{0}', space=sflag, size = 0x4, scoped, tag = 'scoped memory for drqn_forward.8']
    #allocation10 [shape = 'u8[512]{0}', space=vmem, size = 0x400, scoped, tag = 'output window, operand 2, single buffered']
    %10 = vsyncpa [#allocation3], 0
    %11 = vsyncpa [#allocation6], 0
    %12 = vsyncpa [#allocation4], 0
    %13 = vsyncpa [#allocation9], 0
    // Predicated region
    $region2: #{drqn_forward.8} parent=1 // pred_check
      _
    $region3: #{drqn_forward.8} parent=1 // pred_check_branch
      %15 = sbr.rel (0) target = $region5
    $region4: #{drqn_forward.8} parent=1 // pred_region
      %s17 = ssub.s32 1024, 1024
      %18 = vsyncadd [#allocation3], %s17
      %s19 = sshll.u32 [#allocation2], 4
      %s20 = int_to_ptr.vmem [resolvable:$true] %s19
      %25 = dma.hbm_to_vmem [thread:$0]  %s0, 1024, %s20, [#allocation3], 256, 256, 16
    $region5: #{drqn_forward.8} parent=1 // pred_fallthru
      _
    // Predicated region
    $region6: #{drqn_forward.8} parent=1 // pred_check
      _
    $region7: #{drqn_forward.8} parent=1 // pred_check_branch
      %27 = sbr.rel (0) target = $region9
    $region8: #{drqn_forward.8} parent=1 // pred_region
      %s29 = ssub.s32 4096, 4096
      %30 = vsyncadd [#allocation6], %s29
      %s31 = sshll.u32 [#allocation5], 4
      %s32 = int_to_ptr.vmem [resolvable:$true] %s31
      %37 = dma.hbm_to_vmem [thread:$0]  %s1, 4096, %s32, [#allocation6], 64, 64, 4
    $region9: #{drqn_forward.8} parent=1 // pred_fallthru
      _
    // Predicated region
    $region10: #{drqn_forward.8} parent=1 // pred_check
      _
    $region11: #{drqn_forward.8} parent=1 // pred_check_branch
      %39 = sbr.rel (0) target = $region13
    $region12: #{drqn_forward.8} parent=1 // pred_region
      %40 = dma.done [#allocation3], 1024
    $region13: #{drqn_forward.8} parent=1 // pred_fallthru
      _
    // Predicated region
    $region14: #{drqn_forward.8} parent=1 // pred_check
      _
    $region15: #{drqn_forward.8} parent=1 // pred_check_branch
      %42 = sbr.rel (0) target = $region17
    $region16: #{drqn_forward.8} parent=1 // pred_region
      %43 = dma.done [#allocation6], 4096
    $region17: #{drqn_forward.8} parent=1 // pred_fallthru
      _
    %v45 = vld [vmem:[#allocation2] sm:$0xff]
    %v46 = vld [vmem:[#allocation2 + $0x8] sm:$0xff]
    %v47 = vld [vmem:[#allocation2 + $0x10] sm:$0xff]
    %v48 = vld [vmem:[#allocation2 + $0x18] sm:$0xff]
    %v49 = vld [vmem:[#allocation2 + $0x20] sm:$0xff]
    %v50 = vld [vmem:[#allocation2 + $0x28] sm:$0xff]
    %v51 = vld [vmem:[#allocation2 + $0x30] sm:$0xff]
    %v52 = vld [vmem:[#allocation2 + $0x38] sm:$0xff]
    %v53 = vld [vmem:[#allocation5] sm:$0xf]
    %v54 = vld [vmem:[#allocation5 + $0x4] sm:$0xf]
    %v55 = vld [vmem:[#allocation5 + $0x8] sm:$0xf]
    %v56 = vld [vmem:[#allocation5 + $0xc] sm:$0xf]
    %v57 = vld [vmem:[#allocation5 + $0x10] sm:$0xf]
    %v58 = vld [vmem:[#allocation5 + $0x14] sm:$0xf]
    %v59 = vld [vmem:[#allocation5 + $0x18] sm:$0xf]
    %v60 = vld [vmem:[#allocation5 + $0x1c] sm:$0xf]
    %v61 = vld [vmem:[#allocation5 + $0x20] sm:$0xf]
    %v62 = vld [vmem:[#allocation5 + $0x24] sm:$0xf]
    %v63 = vld [vmem:[#allocation5 + $0x28] sm:$0xf]
    %v64 = vld [vmem:[#allocation5 + $0x2c] sm:$0xf]
    %v65 = vld [vmem:[#allocation5 + $0x30] sm:$0xf]
    %v66 = vld [vmem:[#allocation5 + $0x34] sm:$0xf]
    %v67 = vld [vmem:[#allocation5 + $0x38] sm:$0xf]
    %v68 = vld [vmem:[#allocation5 + $0x3c] sm:$0xf]
    %v69 = vld [vmem:[#allocation5 + $0x40] sm:$0xf]
    %v70 = vld [vmem:[#allocation5 + $0x44] sm:$0xf]
    %v71 = vld [vmem:[#allocation5 + $0x48] sm:$0xf]
    %v72 = vld [vmem:[#allocation5 + $0x4c] sm:$0xf]
    %v73 = vld [vmem:[#allocation5 + $0x50] sm:$0xf]
    %v74 = vld [vmem:[#allocation5 + $0x54] sm:$0xf]
    %v75 = vld [vmem:[#allocation5 + $0x58] sm:$0xf]
    %v76 = vld [vmem:[#allocation5 + $0x5c] sm:$0xf]
    %v77 = vld [vmem:[#allocation5 + $0x60] sm:$0xf]
    %v78 = vld [vmem:[#allocation5 + $0x64] sm:$0xf]
    %v79 = vld [vmem:[#allocation5 + $0x68] sm:$0xf]
    %v80 = vld [vmem:[#allocation5 + $0x6c] sm:$0xf]
    %v81 = vld [vmem:[#allocation5 + $0x70] sm:$0xf]
    %v82 = vld [vmem:[#allocation5 + $0x74] sm:$0xf]
    %v83 = vld [vmem:[#allocation5 + $0x78] sm:$0xf]
    %v84 = vld [vmem:[#allocation5 + $0x7c] sm:$0xf]
    %v85 = vld [vmem:[#allocation5 + $0x80] sm:$0xf]
    %v86 = vld [vmem:[#allocation5 + $0x84] sm:$0xf]
    %v87 = vld [vmem:[#allocation5 + $0x88] sm:$0xf]
    %v88 = vld [vmem:[#allocation5 + $0x8c] sm:$0xf]
    %v89 = vld [vmem:[#allocation5 + $0x90] sm:$0xf]
    %v90 = vld [vmem:[#allocation5 + $0x94] sm:$0xf]
    %v91 = vld [vmem:[#allocation5 + $0x98] sm:$0xf]
    %v92 = vld [vmem:[#allocation5 + $0x9c] sm:$0xf]
    %v93 = vld [vmem:[#allocation5 + $0xa0] sm:$0xf]
    %v94 = vld [vmem:[#allocation5 + $0xa4] sm:$0xf]
    %v95 = vld [vmem:[#allocation5 + $0xa8] sm:$0xf]
    %v96 = vld [vmem:[#allocation5 + $0xac] sm:$0xf]
    %v97 = vld [vmem:[#allocation5 + $0xb0] sm:$0xf]
    %v98 = vld [vmem:[#allocation5 + $0xb4] sm:$0xf]
    %v99 = vld [vmem:[#allocation5 + $0xb8] sm:$0xf]
    %v100 = vld [vmem:[#allocation5 + $0xbc] sm:$0xf]
    %v101 = vld [vmem:[#allocation5 + $0xc0] sm:$0xf]
    %v102 = vld [vmem:[#allocation5 + $0xc4] sm:$0xf]
    %v103 = vld [vmem:[#allocation5 + $0xc8] sm:$0xf]
    %v104 = vld [vmem:[#allocation5 + $0xcc] sm:$0xf]
    %v105 = vld [vmem:[#allocation5 + $0xd0] sm:$0xf]
    %v106 = vld [vmem:[#allocation5 + $0xd4] sm:$0xf]
    %v107 = vld [vmem:[#allocation5 + $0xd8] sm:$0xf]
    %v108 = vld [vmem:[#allocation5 + $0xdc] sm:$0xf]
    %v109 = vld [vmem:[#allocation5 + $0xe0] sm:$0xf]
    %v110 = vld [vmem:[#allocation5 + $0xe4] sm:$0xf]
    %v111 = vld [vmem:[#allocation5 + $0xe8] sm:$0xf]
    %v112 = vld [vmem:[#allocation5 + $0xec] sm:$0xf]
    %v113 = vld [vmem:[#allocation5 + $0xf0] sm:$0xf]
    %v114 = vld [vmem:[#allocation5 + $0xf4] sm:$0xf]
    %v115 = vld [vmem:[#allocation5 + $0xf8] sm:$0xf]
    %v116 = vld [vmem:[#allocation5 + $0xfc] sm:$0xf]
    %v125 = vunpack.c.l.b16 %v45
    %v126 = vunpack.c.h.b16 %v45
    %v127 = vunpack.c.l.b16 %v46
    %v128 = vunpack.c.h.b16 %v46
    %v129 = vunpack.c.l.b16 %v47
    %v130 = vunpack.c.h.b16 %v47
    %v131 = vunpack.c.l.b16 %v48
    %v132 = vunpack.c.h.b16 %v48
    %v133 = vunpack.c.l.b16 %v49
    %v134 = vunpack.c.h.b16 %v49
    %v135 = vunpack.c.l.b16 %v50
    %v136 = vunpack.c.h.b16 %v50
    %v137 = vunpack.c.l.b16 %v51
    %v138 = vunpack.c.h.b16 %v51
    %v139 = vunpack.c.l.b16 %v52
    %v140 = vunpack.c.h.b16 %v52
    %v141 = vpack.c.b16 %v129, %v125
    %v142 = vpack.c.b16 %v130, %v126
    %v143 = vpack.c.b16 %v131, %v127
    %v144 = vpack.c.b16 %v132, %v128
    %v145 = vpack.c.b16 %v137, %v133
    %v146 = vpack.c.b16 %v138, %v134
    %v147 = vpack.c.b16 %v139, %v135
    %v148 = vpack.c.b16 %v140, %v136
    %v221 = vunpack.c.l.b16 %v53
    %v222 = vunpack.c.l.b16 %v54
    %v223 = vunpack.c.l.b16 %v55
    %v224 = vunpack.c.l.b16 %v56
    %v225 = vunpack.c.l.b16 %v57
    %v226 = vunpack.c.l.b16 %v58
    %v227 = vunpack.c.l.b16 %v59
    %v228 = vunpack.c.l.b16 %v60
    %v229 = vunpack.c.l.b16 %v61
    %v230 = vunpack.c.l.b16 %v62
    %v231 = vunpack.c.l.b16 %v63
    %v232 = vunpack.c.l.b16 %v64
    %v233 = vunpack.c.l.b16 %v65
    %v234 = vunpack.c.l.b16 %v66
    %v235 = vunpack.c.l.b16 %v67
    %v236 = vunpack.c.l.b16 %v68
    %v237 = vunpack.c.l.b16 %v69
    %v238 = vunpack.c.l.b16 %v70
    %v239 = vunpack.c.l.b16 %v71
    %v240 = vunpack.c.l.b16 %v72
    %v241 = vunpack.c.l.b16 %v73
    %v242 = vunpack.c.l.b16 %v74
    %v243 = vunpack.c.l.b16 %v75
    %v244 = vunpack.c.l.b16 %v76
    %v245 = vunpack.c.l.b16 %v77
    %v246 = vunpack.c.l.b16 %v78
    %v247 = vunpack.c.l.b16 %v79
    %v248 = vunpack.c.l.b16 %v80
    %v249 = vunpack.c.l.b16 %v81
    %v250 = vunpack.c.l.b16 %v82
    %v251 = vunpack.c.l.b16 %v83
    %v252 = vunpack.c.l.b16 %v84
    %v253 = vunpack.c.l.b16 %v85
    %v254 = vunpack.c.l.b16 %v86
    %v255 = vunpack.c.l.b16 %v87
    %v256 = vunpack.c.l.b16 %v88
    %v257 = vunpack.c.l.b16 %v89
    %v258 = vunpack.c.l.b16 %v90
    %v259 = vunpack.c.l.b16 %v91
    %v260 = vunpack.c.l.b16 %v92
    %v261 = vunpack.c.l.b16 %v93
    %v262 = vunpack.c.l.b16 %v94
    %v263 = vunpack.c.l.b16 %v95
    %v264 = vunpack.c.l.b16 %v96
    %v265 = vunpack.c.l.b16 %v97
    %v266 = vunpack.c.l.b16 %v98
    %v267 = vunpack.c.l.b16 %v99
    %v268 = vunpack.c.l.b16 %v100
    %v269 = vunpack.c.l.b16 %v101
    %v270 = vunpack.c.l.b16 %v102
    %v271 = vunpack.c.l.b16 %v103
    %v272 = vunpack.c.l.b16 %v104
    %v273 = vunpack.c.l.b16 %v105
    %v274 = vunpack.c.l.b16 %v106
    %v275 = vunpack.c.l.b16 %v107
    %v276 = vunpack.c.l.b16 %v108
    %v277 = vunpack.c.l.b16 %v109
    %v278 = vunpack.c.l.b16 %v110
    %v279 = vunpack.c.l.b16 %v111
    %v280 = vunpack.c.l.b16 %v112
    %v281 = vunpack.c.l.b16 %v113
    %v282 = vunpack.c.l.b16 %v114
    %v283 = vunpack.c.l.b16 %v115
    %v284 = vunpack.c.l.b16 %v116
    %v285 = vpack.c.b16 %v222, %v221
    %v286 = vpack.c.b16 %v224, %v223
    %v287 = vpack.c.b16 %v226, %v225
    %v288 = vpack.c.b16 %v228, %v227
    %v289 = vpack.c.b16 %v230, %v229
    %v290 = vpack.c.b16 %v232, %v231
    %v291 = vpack.c.b16 %v234, %v233
    %v292 = vpack.c.b16 %v236, %v235
    %v293 = vpack.c.b16 %v238, %v237
    %v294 = vpack.c.b16 %v240, %v239
    %v295 = vpack.c.b16 %v242, %v241
    %v296 = vpack.c.b16 %v244, %v243
    %v297 = vpack.c.b16 %v246, %v245
    %v298 = vpack.c.b16 %v248, %v247
    %v299 = vpack.c.b16 %v250, %v249
    %v300 = vpack.c.b16 %v252, %v251
    %v301 = vpack.c.b16 %v254, %v253
    %v302 = vpack.c.b16 %v256, %v255
    %v303 = vpack.c.b16 %v258, %v257
    %v304 = vpack.c.b16 %v260, %v259
    %v305 = vpack.c.b16 %v262, %v261
    %v306 = vpack.c.b16 %v264, %v263
    %v307 = vpack.c.b16 %v266, %v265
    %v308 = vpack.c.b16 %v268, %v267
    %v309 = vpack.c.b16 %v270, %v269
    %v310 = vpack.c.b16 %v272, %v271
    %v311 = vpack.c.b16 %v274, %v273
    %v312 = vpack.c.b16 %v276, %v275
    %v313 = vpack.c.b16 %v278, %v277
    %v314 = vpack.c.b16 %v280, %v279
    %v315 = vpack.c.b16 %v282, %v281
    %v316 = vpack.c.b16 %v284, %v283
    %349 = vmatprep.subr.bf16.mxu0 0
    %350 = vmatpush1.bf16.msra.mxu0 %v285
    %351 = vmatprep.subr.bf16.mxu0 0
    %352 = vmatpush1.bf16.msra.mxu0 %v286
    %353 = vmatprep.subr.bf16.mxu0 0
    %354 = vmatpush1.bf16.msra.mxu0 %v287
    %355 = vmatprep.subr.bf16.mxu0 0
    %356 = vmatpush1.bf16.msra.mxu0 %v288
    %357 = vmatprep.subr.bf16.mxu0 0
    %358 = vmatpush1.bf16.msra.mxu0 %v289
    %359 = vmatprep.subr.bf16.mxu0 0
    %360 = vmatpush1.bf16.msra.mxu0 %v290
    %361 = vmatprep.subr.bf16.mxu0 0
    %362 = vmatpush1.bf16.msra.mxu0 %v291
    %363 = vmatprep.subr.bf16.mxu0 0
    %364 = vmatpush1.bf16.msra.mxu0 %v292
    %365 = vmatprep.subr.bf16.mxu0 0
    %366 = vmatpush1.bf16.msra.mxu0 %v293
    %367 = vmatprep.subr.bf16.mxu0 0
    %368 = vmatpush1.bf16.msra.mxu0 %v294
    %369 = vmatprep.subr.bf16.mxu0 0
    %370 = vmatpush1.bf16.msra.mxu0 %v295
    %371 = vmatprep.subr.bf16.mxu0 0
    %372 = vmatpush1.bf16.msra.mxu0 %v296
    %373 = vmatprep.subr.bf16.mxu0 0
    %374 = vmatpush1.bf16.msra.mxu0 %v297
    %375 = vmatprep.subr.bf16.mxu0 0
    %376 = vmatpush1.bf16.msra.mxu0 %v298
    %377 = vmatprep.subr.bf16.mxu0 0
    %378 = vmatpush1.bf16.msra.mxu0 %v299
    %379 = vmatprep.subr.bf16.mxu0 0
    %380 = vmatpush1.bf16.msra.mxu0 %v300
    %381 = vmatprep.mubr.bf16.mxu0 %v142
    %382 = vmatmul.mubr.bf16.gmra.mrb[0].mxu0 %v141
    %v383 = vpop.f32.mrb[0].mxu0
    %v384 = vadd.f32 0.0, %v383
    %v385 = vpop.f32.mrb[0].mxu0
    %v386 = vpop.f32.mrb[0].mxu0
    %v387 = vadd.f32 0.0, %v386
    %v388 = vpop.f32.mrb[0].mxu0
    %389 = vmatprep.mubr.bf16.mxu0 %v146
    %390 = vmatmul.mubr.bf16.gmra.mrb[0].mxu0 %v145
    %v391 = vpop.f32.mrb[0].mxu0
    %v392 = vadd.f32 0.0, %v391
    %v393 = vpop.f32.mrb[0].mxu0
    %v394 = vpop.f32.mrb[0].mxu0
    %v395 = vadd.f32 0.0, %v394
    %v396 = vpop.f32.mrb[0].mxu0
    %397 = vdwg.mxu0
    %398 = vmatprep.subr.bf16.mxu0 0
    %399 = vmatpush1.bf16.msra.mxu0 %v301
    %400 = vmatprep.subr.bf16.mxu0 0
    %401 = vmatpush1.bf16.msra.mxu0 %v302
    %402 = vmatprep.subr.bf16.mxu0 0
    %403 = vmatpush1.bf16.msra.mxu0 %v303
    %404 = vmatprep.subr.bf16.mxu0 0
    %405 = vmatpush1.bf16.msra.mxu0 %v304
    %406 = vmatprep.subr.bf16.mxu0 0
    %407 = vmatpush1.bf16.msra.mxu0 %v305
    %408 = vmatprep.subr.bf16.mxu0 0
    %409 = vmatpush1.bf16.msra.mxu0 %v306
    %410 = vmatprep.subr.bf16.mxu0 0
    %411 = vmatpush1.bf16.msra.mxu0 %v307
    %412 = vmatprep.subr.bf16.mxu0 0
    %413 = vmatpush1.bf16.msra.mxu0 %v308
    %414 = vmatprep.subr.bf16.mxu0 0
    %415 = vmatpush1.bf16.msra.mxu0 %v309
    %416 = vmatprep.subr.bf16.mxu0 0
    %417 = vmatpush1.bf16.msra.mxu0 %v310
    %418 = vmatprep.subr.bf16.mxu0 0
    %419 = vmatpush1.bf16.msra.mxu0 %v311
    %420 = vmatprep.subr.bf16.mxu0 0
    %421 = vmatpush1.bf16.msra.mxu0 %v312
    %422 = vmatprep.subr.bf16.mxu0 0
    %423 = vmatpush1.bf16.msra.mxu0 %v313
    %424 = vmatprep.subr.bf16.mxu0 0
    %425 = vmatpush1.bf16.msra.mxu0 %v314
    %426 = vmatprep.subr.bf16.mxu0 0
    %427 = vmatpush1.bf16.msra.mxu0 %v315
    %428 = vmatprep.subr.bf16.mxu0 0
    %429 = vmatpush1.bf16.msra.mxu0 %v316
    %430 = vmatprep.mubr.bf16.mxu0 %v144
    %431 = vmatmul.mubr.bf16.gmra.mrb[0].mxu0 %v143
    %v432 = vpop.f32.mrb[0].mxu0
    %v433 = vadd.f32 %v384, %v432
    %v434 = vpop.f32.mrb[0].mxu0
    %v435 = vpop.f32.mrb[0].mxu0
    %v436 = vadd.f32 %v387, %v435
    %v437 = vpop.f32.mrb[0].mxu0
    %438 = vmatprep.mubr.bf16.mxu0 %v148
    %439 = vmatmul.mubr.bf16.gmra.mrb[0].mxu0 %v147
    %v440 = vpop.f32.mrb[0].mxu0
    %v441 = vadd.f32 %v392, %v440
    %v442 = vpop.f32.mrb[0].mxu0
    %v443 = vpop.f32.mrb[0].mxu0
    %v444 = vadd.f32 %v395, %v443
    %v445 = vpop.f32.mrb[0].mxu0
    %446 = vdwg.mxu0
    %v447 = vpack.c.bf16 %v436, %v433
    %v448 = vpack.c.bf16 %v444, %v441
    %v451 = vunpack.c.l.b16 %v447
    %v452 = vunpack.c.h.b16 %v447
    %v453 = vunpack.c.l.b16 %v448
    %v454 = vunpack.c.h.b16 %v448
    %v455 = vpack.c.b16 %v451, %v451
    %v456 = vpack.c.b16 %v452, %v452
    %v457 = vpack.c.b16 %v453, %v453
    %v458 = vpack.c.b16 %v454, %v454
    %vm463 = vcmask 519168
    %464 = vst.msk [vmem:[#allocation7] sm:$0xf] %vm463, %v455
    %465 = vst.msk [vmem:[#allocation7 + $0x4] sm:$0xf] %vm463, %v456
    %466 = vst.msk [vmem:[#allocation7 + $0x8] sm:$0xf] %vm463, %v457
    %467 = vst.msk [vmem:[#allocation7 + $0xc] sm:$0xf] %vm463, %v458
    %vm468 = vcmask 523264
    %v469 = vsel %vm468, %v433, 0.0
    %v470 = vsel %vm468, %v436, 0.0
    %v471 = vadd.f32 %v469, %v470
    %v472 = vsel %vm468, %v441, 0.0
    %v473 = vadd.f32 %v471, %v472
    %v474 = vsel %vm468, %v444, 0.0
    %v475 = vadd.f32 %v473, %v474
    %v476 = vrot.slane %v475, 4
    %v477 = vadd.f32 %v475, %v476
    %v478 = vrot.slane %v477, 2
    %v479 = vadd.f32 %v477, %v478
    %v480 = vrot.slane %v479, 1
    %v481 = vadd.f32 %v479, %v480
    %vm482 = vcmask 516096
    %483 = vst.msk [vmem:[#allocation8] sm:$0x1] %vm482, %v481
    %v484 = vmul.f32 %v433, %v433
    %v485 = vmul.f32 %v436, %v436
    %v486 = vmul.f32 %v441, %v441
    %v487 = vmul.f32 %v444, %v444
    %v488 = vsel %vm468, %v484, 0.0
    %v489 = vsel %vm468, %v485, 0.0
    %v490 = vadd.f32 %v488, %v489
    %v491 = vsel %vm468, %v486, 0.0
    %v492 = vadd.f32 %v490, %v491
    %v493 = vsel %vm468, %v487, 0.0
    %v494 = vadd.f32 %v492, %v493
    %v495 = vrot.slane %v494, 4
    %v496 = vadd.f32 %v494, %v495
    %v497 = vrot.slane %v496, 2
    %v498 = vadd.f32 %v496, %v497
    %v499 = vrot.slane %v498, 1
    %v500 = vadd.f32 %v498, %v499
    %501 = vst.msk [vmem:[#allocation10] sm:$0x1] %vm482, %v500
    // Predicated region
    $region18: #{drqn_forward.8} parent=1 // pred_check
      _
    $region19: #{drqn_forward.8} parent=1 // pred_check_branch
      %503 = sbr.rel (0) target = $region21
    $region20: #{drqn_forward.8} parent=1 // pred_region
      %s505 = ssub.s32 256, 256
      %506 = vsyncadd [#allocation4], %s505
      %s507 = sshll.u32 [#allocation7], 4
      %s508 = int_to_ptr.vmem [resolvable:$true] %s507
      %513 = dma.vmem_to_hbm [thread:$0]  %s508, 256, %s2, [#allocation4], 64, 64, 4
    $region21: #{drqn_forward.8} parent=1 // pred_fallthru
      _
    // Predicated region
    $region22: #{drqn_forward.8} parent=1 // pred_check
      _
    $region23: #{drqn_forward.8} parent=1 // pred_check_branch
      %515 = sbr.rel (0) target = $region25
    $region24: #{drqn_forward.8} parent=1 // pred_region
      %s517 = ssub.s32 16, 16
      %518 = vsyncadd [#allocation9], %s517
      %s520 = sshll.u32 [#allocation8], 4
      %s521 = int_to_ptr.vmem [resolvable:$true] %s520
      %523 = dma.vmem_to_hbm [thread:$0]  %s521, 16, %s3, [#allocation9]
    $region25: #{drqn_forward.8} parent=1 // pred_fallthru
      _
    // Predicated region
    $region26: #{drqn_forward.8} parent=1 // pred_check
      _
    $region27: #{drqn_forward.8} parent=1 // pred_check_branch
      %525 = sbr.rel (0) target = $region29
    $region28: #{drqn_forward.8} parent=1 // pred_region
      %s527 = ssub.s32 16, 16
      %528 = vsyncadd [#allocation9], %s527
      %s530 = sshll.u32 [#allocation10], 4
      %s531 = int_to_ptr.vmem [resolvable:$true] %s530
      %533 = dma.vmem_to_hbm [thread:$0]  %s531, 16, %s4, [#allocation9]
    $region29: #{drqn_forward.8} parent=1 // pred_fallthru
      _
    // Predicated region
    $region30: #{drqn_forward.8} parent=1 // pred_check
      _
    $region31: #{drqn_forward.8} parent=1 // pred_check_branch
      %535 = sbr.rel (0) target = $region33
    $region32: #{drqn_forward.8} parent=1 // pred_region
      %536 = dma.done [#allocation4], 256
    $region33: #{drqn_forward.8} parent=1 // pred_fallthru
      _
    // Predicated region
    $region34: #{drqn_forward.8} parent=1 // pred_check
      _
    $region35: #{drqn_forward.8} parent=1 // pred_check_branch
      %538 = sbr.rel (0) target = $region37
    $region36: #{drqn_forward.8} parent=1 // pred_region
      %539 = dma.done [#allocation9], 16
    $region37: #{drqn_forward.8} parent=1 // pred_fallthru
      _
    // Predicated region
    $region38: #{drqn_forward.8} parent=1 // pred_check
      _
    $region39: #{drqn_forward.8} parent=1 // pred_check_branch
      %541 = sbr.rel (0) target = $region41
    $region40: #{drqn_forward.8} parent=1 // pred_region
      %542 = dma.done [#allocation9], 16
    $region41: #{drqn_forward.8} parent=1 // pred_fallthru
      _
    %543 = vsyncpa [#allocation3], 1
    %544 = vsyncpa [#allocation6], 1
    %545 = vsyncpa [#allocation4], 1
    %546 = vsyncpa [#allocation9], 1

// kernel: drqn_forward.9
$region0: #{drqn_forward.9}
  #allocation0 [shape = 'u32[]', space=smem, size = 0x4, offset = 0x4, fixed_abs, tag = 'smem constant byte address 0x4 - core index']
  #allocation1 [shape = 'u32[144,128]{1,0:T(1,128)}', space=vmem, size = 0x12000, scoped, tag = 'internal scratch']
  %s0 = inlined_call_operand.hbm [shape: bf16[16,128], index: 0, kind: input, shape index: {}]
  %s1 = inlined_call_operand.hbm [shape: f32[1,128], index: 1, kind: input, shape index: {}]
  %s2 = inlined_call_operand.hbm [shape: f32[1,128], index: 2, kind: input, shape index: {}]
  %s3 = inlined_call_operand.hbm [shape: bf16[16,128], index: 3, kind: output, shape index: {}]
  %s4 = sld [smem:[#allocation0]]
  $region34: #{drqn_forward.9} parent=0
    _
  %s6 = ssub.s32 1, %s4
  %s7 = scalar_select 0, %s6, %s4
  $region1: #{drqn_forward.9} parent=0
    #allocation2 [shape = 'u8[4096]{0}', space=vmem, size = 0x1000, scoped, tag = 'input window, operand 0, single buffered']
    #allocation3 [shape = 's32[1]{0}', space=sflag, size = 0x4, scoped, tag = 'scoped memory for drqn_forward.9']
    #allocation4 [shape = 's32[1]{0}', space=sflag, size = 0x4, scoped, tag = 'scoped memory for drqn_forward.9']
    #allocation5 [shape = 'u8[512]{0}', space=vmem, size = 0x400, scoped, tag = 'input window, operand 1, single buffered']
    #allocation6 [shape = 's32[1]{0}', space=sflag, size = 0x4, scoped, tag = 'scoped memory for drqn_forward.9']
    #allocation7 [shape = 'u8[512]{0}', space=vmem, size = 0x400, scoped, tag = 'input window, operand 2, single buffered']
    #allocation8 [shape = 'u8[4096]{0}', space=vmem, size = 0x1000, scoped, tag = 'output window, operand 0, single buffered']
    %8 = vsyncpa [#allocation3], 0
    %9 = vsyncpa [#allocation6], 0
    %10 = vsyncpa [#allocation4], 0
    // Predicated region
    $region2: #{drqn_forward.9} parent=1 // pred_check
      _
    $region3: #{drqn_forward.9} parent=1 // pred_check_branch
      %12 = sbr.rel (0) target = $region5
    $region4: #{drqn_forward.9} parent=1 // pred_region
      %s14 = ssub.s32 128, 128
      %15 = vsyncadd [#allocation3], %s14
      %s16 = sshll.u32 [#allocation2], 4
      %s17 = int_to_ptr.vmem [resolvable:$true] %s16
      %22 = dma.hbm_to_vmem [thread:$0]  %s0, 128, %s17, [#allocation3], 64, 64, 4
    $region5: #{drqn_forward.9} parent=1 // pred_fallthru
      _
    // Predicated region
    $region6: #{drqn_forward.9} parent=1 // pred_check
      _
    $region7: #{drqn_forward.9} parent=1 // pred_check_branch
      %24 = sbr.rel (0) target = $region9
    $region8: #{drqn_forward.9} parent=1 // pred_region
      %s26 = ssub.s32 16, 16
      %27 = vsyncadd [#allocation6], %s26
      %s29 = sshll.u32 [#allocation5], 4
      %s30 = int_to_ptr.vmem [resolvable:$true] %s29
      %32 = dma.hbm_to_vmem [thread:$0]  %s1, 16, %s30, [#allocation6]
    $region9: #{drqn_forward.9} parent=1 // pred_fallthru
      _
    // Predicated region
    $region10: #{drqn_forward.9} parent=1 // pred_check
      _
    $region11: #{drqn_forward.9} parent=1 // pred_check_branch
      %34 = sbr.rel (0) target = $region13
    $region12: #{drqn_forward.9} parent=1 // pred_region
      %s36 = ssub.s32 16, 16
      %37 = vsyncadd [#allocation6], %s36
      %s39 = sshll.u32 [#allocation7], 4
      %s40 = int_to_ptr.vmem [resolvable:$true] %s39
      %42 = dma.hbm_to_vmem [thread:$0]  %s2, 16, %s40, [#allocation6]
    $region13: #{drqn_forward.9} parent=1 // pred_fallthru
      _
    // Predicated region
    $region14: #{drqn_forward.9} parent=1 // pred_check
      _
    $region15: #{drqn_forward.9} parent=1 // pred_check_branch
      %44 = sbr.rel (0) target = $region17
    $region16: #{drqn_forward.9} parent=1 // pred_region
      %45 = dma.done [#allocation3], 128
    $region17: #{drqn_forward.9} parent=1 // pred_fallthru
      _
    // Predicated region
    $region18: #{drqn_forward.9} parent=1 // pred_check
      _
    $region19: #{drqn_forward.9} parent=1 // pred_check_branch
      %47 = sbr.rel (0) target = $region21
    $region20: #{drqn_forward.9} parent=1 // pred_region
      %48 = dma.done [#allocation6], 16
    $region21: #{drqn_forward.9} parent=1 // pred_fallthru
      _
    // Predicated region
    $region22: #{drqn_forward.9} parent=1 // pred_check
      _
    $region23: #{drqn_forward.9} parent=1 // pred_check_branch
      %50 = sbr.rel (0) target = $region25
    $region24: #{drqn_forward.9} parent=1 // pred_region
      %51 = dma.done [#allocation6], 16
    $region25: #{drqn_forward.9} parent=1 // pred_fallthru
      _
    %v52 = vld [vmem:[#allocation2] sm:$0xf]
    %v53 = vld [vmem:[#allocation2 + $0x4] sm:$0xf]
    %v54 = vunpack.c.l.bf16 %v52
    %v55 = vunpack.c.l.bf16 %v53
    %v56 = vld [vmem:[#allocation5] sm:$0x1]
    %v58 = vlaneseq
    %v59 = vshrl.u32 %v58, 7
    %v60 = vsub.s32 0, %v59
    %v61 = vrot.slane %v56, %v60
    %v63 = vmul.f32 %v54, %v61
    %v64 = vmul.f32 %v55, %v61
    %v65 = vld [vmem:[#allocation7] sm:$0x1]
    %v67 = vlaneseq
    %v68 = vshrl.u32 %v67, 7
    %v69 = vsub.s32 0, %v68
    %v70 = vrot.slane %v65, %v69
    %v72 = vadd.f32 %v63, %v70
    %v73 = vadd.f32 %v64, %v70
    %v74 = vmax.f32 %v72, 0.0
    %v75 = vmax.f32 %v73, 0.0
    %v76 = vpack.c.bf16 %v75, %v74
    %v78 = vunpack.c.l.b16 %v76
    %v79 = vunpack.c.h.b16 %v76
    %v80 = vpack.c.b16 %v78, %v78
    %v81 = vpack.c.b16 %v79, %v79
    %84 = vst [vmem:[#allocation8] sm:$0xf] %v80
    %85 = vst [vmem:[#allocation8 + $0x4] sm:$0xf] %v81
    // Predicated region
    $region26: #{drqn_forward.9} parent=1 // pred_check
      _
    $region27: #{drqn_forward.9} parent=1 // pred_check_branch
      %87 = sbr.rel (0) target = $region29
    $region28: #{drqn_forward.9} parent=1 // pred_region
      %s89 = ssub.s32 128, 128
      %90 = vsyncadd [#allocation4], %s89
      %s91 = sshll.u32 [#allocation8], 4
      %s92 = int_to_ptr.vmem [resolvable:$true] %s91
      %97 = dma.vmem_to_hbm [thread:$0]  %s92, 128, %s3, [#allocation4], 64, 64, 4
    $region29: #{drqn_forward.9} parent=1 // pred_fallthru
      _
    // Predicated region
    $region30: #{drqn_forward.9} parent=1 // pred_check
      _
    $region31: #{drqn_forward.9} parent=1 // pred_check_branch
      %99 = sbr.rel (0) target = $region33
    $region32: #{drqn_forward.9} parent=1 // pred_region
      %100 = dma.done [#allocation4], 128
    $region33: #{drqn_forward.9} parent=1 // pred_fallthru
      _
    %101 = vsyncpa [#allocation3], 1
    %102 = vsyncpa [#allocation6], 1
    %103 = vsyncpa [#allocation4], 1

// kernel: drqn_forward.10
$region0: #{drqn_forward.10}
  #allocation0 [shape = 'u32[]', space=smem, size = 0x4, offset = 0x4, fixed_abs, tag = 'smem constant byte address 0x4 - core index']
  #allocation1 [shape = 'u32[144,128]{1,0:T(1,128)}', space=vmem, size = 0x12000, scoped, tag = 'internal scratch']
  %s0 = inlined_call_operand.hbm [shape: bf16[16,256], index: 0, kind: input, shape index: {}]
  %s1 = inlined_call_operand.hbm [shape: bf16[256,128], index: 1, kind: input, shape index: {}]
  %s2 = inlined_call_operand.hbm [shape: f32[1,128], index: 2, kind: input, shape index: {}]
  %s3 = inlined_call_operand.hbm [shape: bf16[16,128], index: 3, kind: output, shape index: {}]
  %s4 = sld [smem:[#allocation0]]
  $region34: #{drqn_forward.10} parent=0
    _
  %s6 = ssub.s32 1, %s4
  %s7 = scalar_select 0, %s6, %s4
  $region1: #{drqn_forward.10} parent=0
    #allocation2 [shape = 'u8[8192]{0}', space=vmem, size = 0x2000, scoped, tag = 'input window, operand 0, single buffered']
    #allocation3 [shape = 's32[1]{0}', space=sflag, size = 0x4, scoped, tag = 'scoped memory for drqn_forward.10']
    #allocation4 [shape = 's32[1]{0}', space=sflag, size = 0x4, scoped, tag = 'scoped memory for drqn_forward.10']
    #allocation5 [shape = 'u8[65536]{0}', space=vmem, size = 0x10000, scoped, tag = 'input window, operand 1, single buffered']
    #allocation6 [shape = 's32[1]{0}', space=sflag, size = 0x4, scoped, tag = 'scoped memory for drqn_forward.10']
    #allocation7 [shape = 'u8[512]{0}', space=vmem, size = 0x400, scoped, tag = 'input window, operand 2, single buffered']
    #allocation8 [shape = 'u8[4096]{0}', space=vmem, size = 0x1000, scoped, tag = 'output window, operand 0, single buffered']
    %8 = vsyncpa [#allocation3], 0
    %9 = vsyncpa [#allocation6], 0
    %10 = vsyncpa [#allocation4], 0
    // Predicated region
    $region2: #{drqn_forward.10} parent=1 // pred_check
      _
    $region3: #{drqn_forward.10} parent=1 // pred_check_branch
      %12 = sbr.rel (0) target = $region5
    $region4: #{drqn_forward.10} parent=1 // pred_region
      %s14 = ssub.s32 256, 256
      %15 = vsyncadd [#allocation3], %s14
      %s16 = sshll.u32 [#allocation2], 4
      %s17 = int_to_ptr.vmem [resolvable:$true] %s16
      %22 = dma.hbm_to_vmem [thread:$0]  %s0, 256, %s17, [#allocation3], 128, 128, 8
    $region5: #{drqn_forward.10} parent=1 // pred_fallthru
      _
    // Predicated region
    $region6: #{drqn_forward.10} parent=1 // pred_check
      _
    $region7: #{drqn_forward.10} parent=1 // pred_check_branch
      %24 = sbr.rel (0) target = $region9
    $region8: #{drqn_forward.10} parent=1 // pred_region
      %s26 = ssub.s32 2048, 2048
      %27 = vsyncadd [#allocation6], %s26
      %s28 = sshll.u32 [#allocation5], 4
      %s29 = int_to_ptr.vmem [resolvable:$true] %s28
      %34 = dma.hbm_to_vmem [thread:$0]  %s1, 2048, %s29, [#allocation6], 64, 64, 4
    $region9: #{drqn_forward.10} parent=1 // pred_fallthru
      _
    // Predicated region
    $region10: #{drqn_forward.10} parent=1 // pred_check
      _
    $region11: #{drqn_forward.10} parent=1 // pred_check_branch
      %36 = sbr.rel (0) target = $region13
    $region12: #{drqn_forward.10} parent=1 // pred_region
      %s38 = ssub.s32 16, 16
      %39 = vsyncadd [#allocation6], %s38
      %s41 = sshll.u32 [#allocation7], 4
      %s42 = int_to_ptr.vmem [resolvable:$true] %s41
      %44 = dma.hbm_to_vmem [thread:$0]  %s2, 16, %s42, [#allocation6]
    $region13: #{drqn_forward.10} parent=1 // pred_fallthru
      _
    // Predicated region
    $region14: #{drqn_forward.10} parent=1 // pred_check
      _
    $region15: #{drqn_forward.10} parent=1 // pred_check_branch
      %46 = sbr.rel (0) target = $region17
    $region16: #{drqn_forward.10} parent=1 // pred_region
      %47 = dma.done [#allocation3], 256
    $region17: #{drqn_forward.10} parent=1 // pred_fallthru
      _
    // Predicated region
    $region18: #{drqn_forward.10} parent=1 // pred_check
      _
    $region19: #{drqn_forward.10} parent=1 // pred_check_branch
      %49 = sbr.rel (0) target = $region21
    $region20: #{drqn_forward.10} parent=1 // pred_region
      %50 = dma.done [#allocation6], 2048
    $region21: #{drqn_forward.10} parent=1 // pred_fallthru
      _
    // Predicated region
    $region22: #{drqn_forward.10} parent=1 // pred_check
      _
    $region23: #{drqn_forward.10} parent=1 // pred_check_branch
      %52 = sbr.rel (0) target = $region25
    $region24: #{drqn_forward.10} parent=1 // pred_region
      %53 = dma.done [#allocation6], 16
    $region25: #{drqn_forward.10} parent=1 // pred_fallthru
      _
    %v55 = vld [vmem:[#allocation2] sm:$0xff]
    %v56 = vld [vmem:[#allocation2 + $0x8] sm:$0xff]
    %v57 = vld [vmem:[#allocation5] sm:$0xf]
    %v58 = vld [vmem:[#allocation5 + $0x4] sm:$0xf]
    %v59 = vld [vmem:[#allocation5 + $0x8] sm:$0xf]
    %v60 = vld [vmem:[#allocation5 + $0xc] sm:$0xf]
    %v61 = vld [vmem:[#allocation5 + $0x10] sm:$0xf]
    %v62 = vld [vmem:[#allocation5 + $0x14] sm:$0xf]
    %v63 = vld [vmem:[#allocation5 + $0x18] sm:$0xf]
    %v64 = vld [vmem:[#allocation5 + $0x1c] sm:$0xf]
    %v65 = vld [vmem:[#allocation5 + $0x20] sm:$0xf]
    %v66 = vld [vmem:[#allocation5 + $0x24] sm:$0xf]
    %v67 = vld [vmem:[#allocation5 + $0x28] sm:$0xf]
    %v68 = vld [vmem:[#allocation5 + $0x2c] sm:$0xf]
    %v69 = vld [vmem:[#allocation5 + $0x30] sm:$0xf]
    %v70 = vld [vmem:[#allocation5 + $0x34] sm:$0xf]
    %v71 = vld [vmem:[#allocation5 + $0x38] sm:$0xf]
    %v72 = vld [vmem:[#allocation5 + $0x3c] sm:$0xf]
    %v73 = vld [vmem:[#allocation5 + $0x40] sm:$0xf]
    %v74 = vld [vmem:[#allocation5 + $0x44] sm:$0xf]
    %v75 = vld [vmem:[#allocation5 + $0x48] sm:$0xf]
    %v76 = vld [vmem:[#allocation5 + $0x4c] sm:$0xf]
    %v77 = vld [vmem:[#allocation5 + $0x50] sm:$0xf]
    %v78 = vld [vmem:[#allocation5 + $0x54] sm:$0xf]
    %v79 = vld [vmem:[#allocation5 + $0x58] sm:$0xf]
    %v80 = vld [vmem:[#allocation5 + $0x5c] sm:$0xf]
    %v81 = vld [vmem:[#allocation5 + $0x60] sm:$0xf]
    %v82 = vld [vmem:[#allocation5 + $0x64] sm:$0xf]
    %v83 = vld [vmem:[#allocation5 + $0x68] sm:$0xf]
    %v84 = vld [vmem:[#allocation5 + $0x6c] sm:$0xf]
    %v85 = vld [vmem:[#allocation5 + $0x70] sm:$0xf]
    %v86 = vld [vmem:[#allocation5 + $0x74] sm:$0xf]
    %v87 = vld [vmem:[#allocation5 + $0x78] sm:$0xf]
    %v88 = vld [vmem:[#allocation5 + $0x7c] sm:$0xf]
    %v89 = vld [vmem:[#allocation7] sm:$0x1]
    %v91 = vlaneseq
    %v92 = vshrl.u32 %v91, 7
    %v93 = vsub.s32 0, %v92
    %v94 = vrot.slane %v89, %v93
    %v98 = vunpack.c.l.b16 %v55
    %v99 = vunpack.c.h.b16 %v55
    %v100 = vunpack.c.l.b16 %v56
    %v101 = vunpack.c.h.b16 %v56
    %v102 = vpack.c.b16 %v100, %v98
    %v103 = vpack.c.b16 %v101, %v99
    %v138 = vunpack.c.l.b16 %v57
    %v139 = vunpack.c.l.b16 %v58
    %v140 = vunpack.c.l.b16 %v59
    %v141 = vunpack.c.l.b16 %v60
    %v142 = vunpack.c.l.b16 %v61
    %v143 = vunpack.c.l.b16 %v62
    %v144 = vunpack.c.l.b16 %v63
    %v145 = vunpack.c.l.b16 %v64
    %v146 = vunpack.c.l.b16 %v65
    %v147 = vunpack.c.l.b16 %v66
    %v148 = vunpack.c.l.b16 %v67
    %v149 = vunpack.c.l.b16 %v68
    %v150 = vunpack.c.l.b16 %v69
    %v151 = vunpack.c.l.b16 %v70
    %v152 = vunpack.c.l.b16 %v71
    %v153 = vunpack.c.l.b16 %v72
    %v154 = vunpack.c.l.b16 %v73
    %v155 = vunpack.c.l.b16 %v74
    %v156 = vunpack.c.l.b16 %v75
    %v157 = vunpack.c.l.b16 %v76
    %v158 = vunpack.c.l.b16 %v77
    %v159 = vunpack.c.l.b16 %v78
    %v160 = vunpack.c.l.b16 %v79
    %v161 = vunpack.c.l.b16 %v80
    %v162 = vunpack.c.l.b16 %v81
    %v163 = vunpack.c.l.b16 %v82
    %v164 = vunpack.c.l.b16 %v83
    %v165 = vunpack.c.l.b16 %v84
    %v166 = vunpack.c.l.b16 %v85
    %v167 = vunpack.c.l.b16 %v86
    %v168 = vunpack.c.l.b16 %v87
    %v169 = vunpack.c.l.b16 %v88
    %v170 = vpack.c.b16 %v139, %v138
    %v171 = vpack.c.b16 %v141, %v140
    %v172 = vpack.c.b16 %v143, %v142
    %v173 = vpack.c.b16 %v145, %v144
    %v174 = vpack.c.b16 %v147, %v146
    %v175 = vpack.c.b16 %v149, %v148
    %v176 = vpack.c.b16 %v151, %v150
    %v177 = vpack.c.b16 %v153, %v152
    %v178 = vpack.c.b16 %v155, %v154
    %v179 = vpack.c.b16 %v157, %v156
    %v180 = vpack.c.b16 %v159, %v158
    %v181 = vpack.c.b16 %v161, %v160
    %v182 = vpack.c.b16 %v163, %v162
    %v183 = vpack.c.b16 %v165, %v164
    %v184 = vpack.c.b16 %v167, %v166
    %v185 = vpack.c.b16 %v169, %v168
    %202 = vmatprep.subr.bf16.mxu0 0
    %203 = vmatpush1.bf16.msra.mxu0 %v170
    %204 = vmatprep.subr.bf16.mxu0 0
    %205 = vmatpush1.bf16.msra.mxu0 %v171
    %206 = vmatprep.subr.bf16.mxu0 0
    %207 = vmatpush1.bf16.msra.mxu0 %v172
    %208 = vmatprep.subr.bf16.mxu0 0
    %209 = vmatpush1.bf16.msra.mxu0 %v173
    %210 = vmatprep.subr.bf16.mxu0 0
    %211 = vmatpush1.bf16.msra.mxu0 %v174
    %212 = vmatprep.subr.bf16.mxu0 0
    %213 = vmatpush1.bf16.msra.mxu0 %v175
    %214 = vmatprep.subr.bf16.mxu0 0
    %215 = vmatpush1.bf16.msra.mxu0 %v176
    %216 = vmatprep.subr.bf16.mxu0 0
    %217 = vmatpush1.bf16.msra.mxu0 %v177
    %218 = vmatprep.subr.bf16.mxu0 0
    %219 = vmatpush1.bf16.msra.mxu0 %v178
    %220 = vmatprep.subr.bf16.mxu0 0
    %221 = vmatpush1.bf16.msra.mxu0 %v179
    %222 = vmatprep.subr.bf16.mxu0 0
    %223 = vmatpush1.bf16.msra.mxu0 %v180
    %224 = vmatprep.subr.bf16.mxu0 0
    %225 = vmatpush1.bf16.msra.mxu0 %v181
    %226 = vmatprep.subr.bf16.mxu0 0
    %227 = vmatpush1.bf16.msra.mxu0 %v182
    %228 = vmatprep.subr.bf16.mxu0 0
    %229 = vmatpush1.bf16.msra.mxu0 %v183
    %230 = vmatprep.subr.bf16.mxu0 0
    %231 = vmatpush1.bf16.msra.mxu0 %v184
    %232 = vmatprep.subr.bf16.mxu0 0
    %233 = vmatpush1.bf16.msra.mxu0 %v185
    %234 = vmatprep.mubr.bf16.mxu0 %v103
    %235 = vmatmul.mubr.bf16.gmra.mrb[0].mxu0 %v102
    %v236 = vpop.f32.mrb[0].mxu0
    %v237 = vadd.f32 %v94, %v236
    %v238 = vpop.f32.mrb[0].mxu0
    %v239 = vpop.f32.mrb[0].mxu0
    %v240 = vadd.f32 %v94, %v239
    %v241 = vpop.f32.mrb[0].mxu0
    %242 = vdwg.mxu0
    %v243 = vpack.c.bf16 %v240, %v237
    %v245 = vunpack.c.l.b16 %v243
    %v246 = vunpack.c.h.b16 %v243
    %v247 = vpack.c.b16 %v245, %v245
    %v248 = vpack.c.b16 %v246, %v246
    %251 = vst [vmem:[#allocation8] sm:$0xf] %v247
    %252 = vst [vmem:[#allocation8 + $0x4] sm:$0xf] %v248
    // Predicated region
    $region26: #{drqn_forward.10} parent=1 // pred_check
      _
    $region27: #{drqn_forward.10} parent=1 // pred_check_branch
      %254 = sbr.rel (0) target = $region29
    $region28: #{drqn_forward.10} parent=1 // pred_region
      %s256 = ssub.s32 128, 128
      %257 = vsyncadd [#allocation4], %s256
      %s258 = sshll.u32 [#allocation8], 4
      %s259 = int_to_ptr.vmem [resolvable:$true] %s258
      %264 = dma.vmem_to_hbm [thread:$0]  %s259, 128, %s3, [#allocation4], 64, 64, 4
    $region29: #{drqn_forward.10} parent=1 // pred_fallthru
      _
    // Predicated region
    $region30: #{drqn_forward.10} parent=1 // pred_check
      _
    $region31: #{drqn_forward.10} parent=1 // pred_check_branch
      %266 = sbr.rel (0) target = $region33
    $region32: #{drqn_forward.10} parent=1 // pred_region
      %267 = dma.done [#allocation4], 128
    $region33: #{drqn_forward.10} parent=1 // pred_fallthru
      _
    %268 = vsyncpa [#allocation3], 1
    %269 = vsyncpa [#allocation6], 1
    %270 = vsyncpa [#allocation4], 1

// kernel: drqn_forward.11
$region0: #{drqn_forward.11}
  #allocation0 [shape = 'u32[]', space=smem, size = 0x4, offset = 0x4, fixed_abs, tag = 'smem constant byte address 0x4 - core index']
  #allocation1 [shape = 'u32[144,128]{1,0:T(1,128)}', space=vmem, size = 0x12000, scoped, tag = 'internal scratch']
  %s0 = inlined_call_operand.hbm [shape: bf16[3,8,128], index: 0, kind: input, shape index: {}]
  %s1 = inlined_call_operand.hbm [shape: bf16[32,128], index: 1, kind: input, shape index: {}]
  %s2 = inlined_call_operand.hbm [shape: f32[8,32], index: 2, kind: input, shape index: {}]
  %s3 = inlined_call_operand.hbm [shape: f32[8,32], index: 3, kind: input, shape index: {}]
  %s4 = inlined_call_operand.hbm [shape: f32[3,8,32], index: 4, kind: output, shape index: {0}]
  %s5 = inlined_call_operand.hbm [shape: f32[8,32], index: 5, kind: output, shape index: {1}]
  %s6 = inlined_call_operand.hbm [shape: f32[8,32], index: 6, kind: output, shape index: {2}]
  %7 = xla_tuple %s4, %s5, %s6
  %s8 = sld [smem:[#allocation0]]
  $region65: #{drqn_forward.11} parent=0
    _
  %s10 = ssub.s32 1, %s8
  %s11 = scalar_select 0, %s10, %s8
  $region1: #{drqn_forward.11} parent=0
    #allocation2 [shape = 'u8[6144]{0}', space=vmem, size = 0x1800, scoped, tag = 'input window, operand 0, single buffered']
    #allocation3 [shape = 's32[1]{0}', space=sflag, size = 0x4, scoped, tag = 'scoped memory for drqn_forward.11']
    #allocation4 [shape = 's32[1]{0}', space=sflag, size = 0x4, scoped, tag = 'scoped memory for drqn_forward.11']
    #allocation5 [shape = 'u8[8192]{0}', space=vmem, size = 0x2000, scoped, tag = 'input window, operand 1, single buffered']
    #allocation6 [shape = 's32[1]{0}', space=sflag, size = 0x4, scoped, tag = 'scoped memory for drqn_forward.11']
    #allocation7 [shape = 'u8[4096]{0}', space=vmem, size = 0x1000, scoped, tag = 'input window, operand 2, single buffered']
    #allocation8 [shape = 'u8[4096]{0}', space=vmem, size = 0x1000, scoped, tag = 'input window, operand 3, single buffered']
    #allocation9 [shape = 's32[1]{0}', space=sflag, size = 0x4, scoped, tag = 'scoped memory for drqn_forward.11']
    #allocation10 [shape = 'u8[12288]{0}', space=vmem, size = 0x3000, scoped, tag = 'output window, operand 0, single buffered']
    #allocation11 [shape = 'u8[4096]{0}', space=vmem, size = 0x1000, scoped, tag = 'output window, operand 1, single buffered']
    #allocation12 [shape = 's32[1]{0}', space=sflag, size = 0x4, scoped, tag = 'scoped memory for drqn_forward.11']
    #allocation13 [shape = 'u8[4096]{0}', space=vmem, size = 0x1000, scoped, tag = 'output window, operand 2, single buffered']
    %12 = vsyncpa [#allocation3], 0
    %13 = vsyncpa [#allocation6], 0
    %14 = vsyncpa [#allocation9], 0
    %15 = vsyncpa [#allocation4], 0
    %16 = vsyncpa [#allocation12], 0
    // Predicated region
    $region2: #{drqn_forward.11} parent=1 // pred_check
      _
    $region3: #{drqn_forward.11} parent=1 // pred_check_branch
      %18 = sbr.rel (0) target = $region5
    $region4: #{drqn_forward.11} parent=1 // pred_region
      %s20 = ssub.s32 192, 192
      %21 = vsyncadd [#allocation3], %s20
      %s22 = sshll.u32 [#allocation2], 4
      %s23 = int_to_ptr.vmem [resolvable:$true] %s22
      %28 = dma.hbm_to_vmem [thread:$0]  %s0, 192, %s23, [#allocation3], 64, 64, 4
    $region5: #{drqn_forward.11} parent=1 // pred_fallthru
      _
    // Predicated region
    $region6: #{drqn_forward.11} parent=1 // pred_check
      _
    $region7: #{drqn_forward.11} parent=1 // pred_check_branch
      %30 = sbr.rel (0) target = $region9
    $region8: #{drqn_forward.11} parent=1 // pred_region
      %s32 = ssub.s32 256, 256
      %33 = vsyncadd [#allocation6], %s32
      %s34 = sshll.u32 [#allocation5], 4
      %s35 = int_to_ptr.vmem [resolvable:$true] %s34
      %40 = dma.hbm_to_vmem [thread:$0]  %s1, 256, %s35, [#allocation6], 64, 64, 4
    $region9: #{drqn_forward.11} parent=1 // pred_fallthru
      _
    // Predicated region
    $region10: #{drqn_forward.11} parent=1 // pred_check
      _
    $region11: #{drqn_forward.11} parent=1 // pred_check_branch
      %42 = sbr.rel (0) target = $region13
    $region12: #{drqn_forward.11} parent=1 // pred_region
      %s44 = ssub.s32 128, 128
      %45 = vsyncadd [#allocation6], %s44
      %s47 = sshll.u32 [#allocation7], 4
      %s48 = int_to_ptr.vmem [resolvable:$true] %s47
      %50 = dma.hbm_to_vmem [thread:$0]  %s2, 128, %s48, [#allocation6]
    $region13: #{drqn_forward.11} parent=1 // pred_fallthru
      _
    // Predicated region
    $region14: #{drqn_forward.11} parent=1 // pred_check
      _
    $region15: #{drqn_forward.11} parent=1 // pred_check_branch
      %52 = sbr.rel (0) target = $region17
    $region16: #{drqn_forward.11} parent=1 // pred_region
      %s54 = ssub.s32 128, 128
      %55 = vsyncadd [#allocation9], %s54
      %s57 = sshll.u32 [#allocation8], 4
      %s58 = int_to_ptr.vmem [resolvable:$true] %s57
      %60 = dma.hbm_to_vmem [thread:$0]  %s3, 128, %s58, [#allocation9]
    $region17: #{drqn_forward.11} parent=1 // pred_fallthru
      _
    // Predicated region
    $region18: #{drqn_forward.11} parent=1 // pred_check
      _
    $region19: #{drqn_forward.11} parent=1 // pred_check_branch
      %62 = sbr.rel (0) target = $region21
    $region20: #{drqn_forward.11} parent=1 // pred_region
      %63 = dma.done [#allocation3], 192
    $region21: #{drqn_forward.11} parent=1 // pred_fallthru
      _
    // Predicated region
    $region22: #{drqn_forward.11} parent=1 // pred_check
      _
    $region23: #{drqn_forward.11} parent=1 // pred_check_branch
      %65 = sbr.rel (0) target = $region25
    $region24: #{drqn_forward.11} parent=1 // pred_region
      %66 = dma.done [#allocation6], 256
    $region25: #{drqn_forward.11} parent=1 // pred_fallthru
      _
    // Predicated region
    $region26: #{drqn_forward.11} parent=1 // pred_check
      _
    $region27: #{drqn_forward.11} parent=1 // pred_check_branch
      %68 = sbr.rel (0) target = $region29
    $region28: #{drqn_forward.11} parent=1 // pred_region
      %69 = dma.done [#allocation6], 128
    $region29: #{drqn_forward.11} parent=1 // pred_fallthru
      _
    // Predicated region
    $region30: #{drqn_forward.11} parent=1 // pred_check
      _
    $region31: #{drqn_forward.11} parent=1 // pred_check_branch
      %71 = sbr.rel (0) target = $region33
    $region32: #{drqn_forward.11} parent=1 // pred_region
      %72 = dma.done [#allocation9], 128
    $region33: #{drqn_forward.11} parent=1 // pred_fallthru
      _
    %v74 = vld [vmem:[#allocation5] sm:$0xf]
    %v75 = vld [vmem:[#allocation5 + $0x4] sm:$0xf]
    %v76 = vld [vmem:[#allocation5 + $0x8] sm:$0xf]
    %v77 = vld [vmem:[#allocation5 + $0xc] sm:$0xf]
    %v78 = vld [vmem:[#allocation7] sm:$0xff]
    %v79 = vld [vmem:[#allocation8] sm:$0xff]
    loop: start=0, step=1, limit=3
    $region34: #{drqn_forward.11} parent=1 // loop_pre_header
      _
    $region35: #{drqn_forward.11} parent=1 // loop_header
      %s81 = sphi 0, %s85
      %p82 = scmp.ge.s32.totalorder %s81, 3
      %v86 = vphi %v78, %v180
      %v87 = vphi %v79, %v187
    $region36: #{drqn_forward.11} parent=1 // loop_header_branch
      %84 = sbr.rel (%p82) target = $region40
    $region37: #{drqn_forward.11} parent=1 // loop_body
      %s88 = smul.addr %s81, 4
      %s89 = scalar_lea.vmem [#allocation2], %s88
      %v90 = vld [vmem:[%s89] sm:$0xf]
      %v91 = vunpack.c.l.bf16 %v90
      %v92 = vpack.c.bf16 %v86, %v86
      %v97 = vunpack.c.l.b16 %v74
      %v98 = vunpack.c.l.b16 %v75
      %v99 = vunpack.c.l.b16 %v76
      %v100 = vunpack.c.l.b16 %v77
      %v101 = vpack.c.b16 %v98, %v97
      %v102 = vpack.c.b16 %v100, %v99
      %vm105 = vcmask 261120
      %v107 = vsel %vm105, %v92, 0
      %109 = vmatprep.subr.bf16.mxu0 0
      %110 = vmatpush1.bf16.msra.mxu0 %v101
      %111 = vmatprep.subr.bf16.mxu0 0
      %112 = vmatpush1.bf16.msra.mxu0 %v102
      %113 = vmatprep.subr.bf16.mxu0 0
      %114 = vmatpush1.bf16.msra.mxu0 0
      %115 = vmatprep.subr.bf16.mxu0 0
      %116 = vmatpush1.bf16.msra.mxu0 0
      %117 = vmatprep.subr.bf16.mxu0 0
      %118 = vmatpush1.bf16.msra.mxu0 0
      %119 = vmatprep.subr.bf16.mxu0 0
      %120 = vmatpush1.bf16.msra.mxu0 0
      %121 = vmatprep.subr.bf16.mxu0 0
      %122 = vmatpush1.bf16.msra.mxu0 0
      %123 = vmatprep.subr.bf16.mxu0 0
      %124 = vmatpush1.bf16.msra.mxu0 0
      %125 = vmatprep.subr.bf16.mxu0 0
      %126 = vmatpush1.bf16.msra.mxu0 0
      %127 = vmatprep.subr.bf16.mxu0 0
      %128 = vmatpush1.bf16.msra.mxu0 0
      %129 = vmatprep.subr.bf16.mxu0 0
      %130 = vmatpush1.bf16.msra.mxu0 0
      %131 = vmatprep.subr.bf16.mxu0 0
      %132 = vmatpush1.bf16.msra.mxu0 0
      %133 = vmatprep.subr.bf16.mxu0 0
      %134 = vmatpush1.bf16.msra.mxu0 0
      %135 = vmatprep.subr.bf16.mxu0 0
      %136 = vmatpush1.bf16.msra.mxu0 0
      %137 = vmatprep.subr.bf16.mxu0 0
      %138 = vmatpush1.bf16.msra.mxu0 0
      %139 = vmatprep.subr.bf16.mxu0 0
      %140 = vmatpush1.bf16.msra.mxu0 0
      %141 = vmatprep.mubr.bf16.mxu0 0
      %142 = vmatmul.mubr.bf16.gmra.mrb[0].mxu0 %v107
      %v143 = vpop.f32.mrb[0].mxu0
      %v144 = vadd.f32 0.0, %v143
      %v145 = vpop.f32.mrb[0].mxu0
      %v146 = vpop.f32.mrb[0].mxu0
      %v147 = vpop.f32.mrb[0].mxu0
      %148 = vdwg.mxu0
      %v149 = vadd.f32 %v91, %v144
      %v150 = vxor.u32 %v149, 2147483648
      %v151 = vmul.f32 %v150, 1.442695
      %v152 = vpow.pop %v151
      %v153 = vadd.f32 %v152, 1.0
      %v154 = vrcp.pop %v153
      %v155 = vmul.f32 1.0, %v154
      %v156 = vtanh.pop %v149
      %158 = vrot.lane.b32.xlu0 %v87, 32
      %v159 = vpop.permute.xlu0 %158
      %v161 = vmul.f32 %v155, %v159
      %163 = vrot.lane.b32.xlu0 %v156, 64
      %v164 = vpop.permute.xlu0 %163
      %v166 = vmul.f32 %v155, %v164
      %168 = vrot.lane.b32.xlu0 %v166, 32
      %v169 = vpop.permute.xlu0 %168
      %v171 = vadd.f32 %v161, %v169
      %v172 = vtanh.pop %v171
      %174 = vrot.lane.b32.xlu0 %v172, 64
      %v175 = vpop.permute.xlu0 %174
      %v177 = vmul.f32 %v155, %v175
      %179 = vrot.lane.b32.xlu0 %v177, 32
      %v180 = vpop.permute.xlu0 %179
      %s182 = smul.u32 %s81, 8
      %s183 = scalar_lea.vmem [#allocation10], %s182
      %184 = vst.msk [vmem:[%s183] sm:$0xff] %vm105, %v180
      %186 = vrot.lane.b32.xlu0 %v171, 96
      %v187 = vpop.permute.xlu0 %186
    $region38: #{drqn_forward.11} parent=1 // loop_footer
      %s85 = sadd.s32 1, %s81
    $region39: #{drqn_forward.11} parent=1 // loop_footer_branch
      %80 = sbr.rel target = $region35
    $region40: #{drqn_forward.11} parent=1 // loop_exit
      _
    %vm189 = vcmask 261120
    %190 = vst.msk [vmem:[#allocation11] sm:$0xff] %vm189, %v86
    %191 = vst.msk [vmem:[#allocation13] sm:$0xff] %vm189, %v87
    // Predicated region
    $region41: #{drqn_forward.11} parent=1 // pred_check
      _
    $region42: #{drqn_forward.11} parent=1 // pred_check_branch
      %193 = sbr.rel (0) target = $region44
    $region43: #{drqn_forward.11} parent=1 // pred_region
      %s195 = ssub.s32 384, 384
      %196 = vsyncadd [#allocation4], %s195
      %s197 = sshll.u32 [#allocation10], 4
      %s198 = int_to_ptr.vmem [resolvable:$true] %s197
      %203 = dma.vmem_to_hbm [thread:$0]  %s198, 384, %s4, [#allocation4], 128, 128, 8
    $region44: #{drqn_forward.11} parent=1 // pred_fallthru
      _
    // Predicated region
    $region45: #{drqn_forward.11} parent=1 // pred_check
      _
    $region46: #{drqn_forward.11} parent=1 // pred_check_branch
      %205 = sbr.rel (0) target = $region48
    $region47: #{drqn_forward.11} parent=1 // pred_region
      %s207 = ssub.s32 128, 128
      %208 = vsyncadd [#allocation12], %s207
      %s210 = sshll.u32 [#allocation11], 4
      %s211 = int_to_ptr.vmem [resolvable:$true] %s210
      %213 = dma.vmem_to_hbm [thread:$0]  %s211, 128, %s5, [#allocation12]
    $region48: #{drqn_forward.11} parent=1 // pred_fallthru
      _
    // Predicated region
    $region49: #{drqn_forward.11} parent=1 // pred_check
      _
    $region50: #{drqn_forward.11} parent=1 // pred_check_branch
      %215 = sbr.rel (0) target = $region52
    $region51: #{drqn_forward.11} parent=1 // pred_region
      %s217 = ssub.s32 128, 128
      %218 = vsyncadd [#allocation12], %s217
      %s220 = sshll.u32 [#allocation13], 4
      %s221 = int_to_ptr.vmem [resolvable:$true] %s220
      %223 = dma.vmem_to_hbm [thread:$0]  %s221, 128, %s6, [#allocation12]
    $region52: #{drqn_forward.11} parent=1 // pred_fallthru
      _
    // Predicated region
    $region53: #{drqn_forward.11} parent=1 // pred_check
      _
    $region54: #{drqn_forward.11} parent=1 // pred_check_branch
      %225 = sbr.rel (0) target = $region56
    $region55: #{drqn_forward.11} parent=1 // pred_region
      %226 = dma.done [#allocation4], 384
    $region56: #{drqn_forward.11} parent=1 // pred_fallthru
      _
    // Predicated region
    $region57: #{drqn_forward.11} parent=1 // pred_check
      _
    $region58: #{drqn_forward.11} parent=1 // pred_check_branch
      %228 = sbr.rel (0) target = $region60
    $region59: #{drqn_forward.11} parent=1 // pred_region
      %229 = dma.done [#allocation12], 128
    $region60: #{drqn_forward.11} parent=1 // pred_fallthru
      _
    // Predicated region
    $region61: #{drqn_forward.11} parent=1 // pred_check
      _
    $region62: #{drqn_forward.11} parent=1 // pred_check_branch
      %231 = sbr.rel (0) target = $region64
    $region63: #{drqn_forward.11} parent=1 // pred_region
      %232 = dma.done [#allocation12], 128
    $region64: #{drqn_forward.11} parent=1 // pred_fallthru
      _
    %233 = vsyncpa [#allocation3], 1
    %234 = vsyncpa [#allocation6], 1
    %235 = vsyncpa [#allocation9], 1
    %236 = vsyncpa [#allocation4], 1
    %237 = vsyncpa [#allocation12], 1

</llo_original>
